<compile_context>
chip_gen: v5e
topology: v5e:2x2
jax: 0.10.0
libtpu: 0.0.40
codegen_flags: <defaults>
</compile_context>

<pallas_src>
import functools

import jax
import jax.numpy as jnp
from jax.experimental import pallas as pl
from jax.experimental.pallas import tpu as pltpu

BN_EPS = 1e-5   # nn.BatchNorm2d default eps


def conv_stats_kernel(H, W, x_ref, w_ref, mask_ref, y_ref, sum_ref, sq_ref):
    # x_ref:    (1, Cin, Lp)   flattened zero-padded image, Lp = (H+3)*(W+2)
    # w_ref:    (9, Cout, Cin) per-tap weights, VMEM-resident across the grid
    # mask_ref: (1, Lv)        1.0 at valid flat positions, 0.0 at the 2
    #                          wrap-around columns per row, Lv = H*(W+2)
    # y_ref:    (1, Cout, Lv)  conv output (compute/store dtype)
    # sum_ref:  (1, Cout, 1)   per-image per-channel sum (f32)
    # sq_ref:   (1, Cout, 1)   per-image per-channel sum of squares (f32)
    Wp = W + 2
    Lv = H * Wp
    xb = x_ref[0]                                   # (Cin, Lp)
    cout = w_ref.shape[1]

    acc = jnp.zeros((cout, Lv), dtype=jnp.float32)
    for kh in range(3):                             # 9 accumulating MXU matmuls
        for kw in range(3):
            off = kh * Wp + kw                      # static lane offset
            acc = acc + jnp.dot(
                w_ref[kh * 3 + kw], xb[:, off:off + Lv],
                preferred_element_type=jnp.float32)

    acc = acc * mask_ref[...]                       # zero the wrap-around cols
    y_ref[0] = acc.astype(y_ref.dtype)
    sum_ref[0] = jnp.sum(acc, axis=1, keepdims=True)
    sq_ref[0] = jnp.sum(acc * acc, axis=1, keepdims=True)


def bn_relu_kernel(W, x_ref, scale_ref, shift_ref, o_ref):
    # x_ref: (1, Cout, H, W+2) conv output (compute dtype)
    # scale_ref / shift_ref: (Cout, 1, 1) folded BN affine, VMEM-resident
    # o_ref: (1, Cout, H, W)   final NCHW activation (f32)
    x = x_ref[0][:, :, :W].astype(jnp.float32)      # drop the 2 pad columns
    o_ref[0] = jnp.maximum(x * scale_ref[...] + shift_ref[...], 0.0)


def conv_block_forward(x_nchw, w_hwio, bias, gamma, beta, *,
                       compute_dtype=jnp.bfloat16):
    """ConvBlock forward.

    x_nchw: (N, Cin, H, W) f32; w_hwio: (3, 3, Cin, Cout);
    bias/gamma/beta: (Cout,).  `bias` is accepted for API parity but not
    added: it cancels exactly in training-mode BN's mean subtraction.
    The conv intermediate is stored in `compute_dtype` (bf16 in production).
    """
    del bias
    N, Cin, H, W = x_nchw.shape
    Cout = w_hwio.shape[-1]
    Wp = W + 2
    Lp = (H + 3) * Wp          # 1 top pad row, 2 bottom pad rows (the extra row
                               # only absorbs the flat-window overshoot of the
                               # last taps; it is never part of a valid output)
    Lv = H * Wp
    M = N * H * W
    in_bytes = jnp.dtype(compute_dtype).itemsize

    # ---- glue (XLA): spatial zero-pad + flatten. No transpose, no im2col. ----
    x_pad = jnp.pad(x_nchw, ((0, 0), (0, 0), (1, 2), (1, 1)))
    x_flat = x_pad.reshape(N, Cin, Lp).astype(compute_dtype)

    # Per-tap weights as (9, Cout, Cin): tap t = kh*3+kw.
    w_taps = jnp.transpose(w_hwio, (0, 1, 3, 2)).reshape(9, Cout, Cin)
    w_taps = w_taps.astype(compute_dtype)

    # Valid-column mask for the flat window: (p % Wp) < W.
    col_mask = (jnp.arange(Lv) % Wp < W).astype(jnp.float32).reshape(1, Lv)

    # ---- pass 1: per-image conv (9 tap matmuls) + per-image channel stats ---
    cost1 = pl.CostEstimate(
        flops=2 * N * Cout * Lv * 9 * Cin,
        transcendentals=0,
        bytes_accessed=(N * Cin * Lp * in_bytes + 9 * Cout * Cin * in_bytes
                        + Lv * 4 + N * Cout * Lv * in_bytes + 2 * N * Cout * 4),
    )
    conv_out, ch_sum, ch_sq = pl.pallas_call(
        functools.partial(conv_stats_kernel, H, W),
        grid=(N,),
        in_specs=[
            pl.BlockSpec((1, Cin, Lp), lambda n: (n, 0, 0)),
            pl.BlockSpec((9, Cout, Cin), lambda n: (0, 0, 0)),   # resident
            pl.BlockSpec((1, Lv), lambda n: (0, 0)),             # resident
        ],
        out_specs=[
            pl.BlockSpec((1, Cout, Lv), lambda n: (n, 0, 0)),
            pl.BlockSpec((1, Cout, 1), lambda n: (n, 0, 0)),     # per-image partials
            pl.BlockSpec((1, Cout, 1), lambda n: (n, 0, 0)),
        ],
        out_shape=[
            jax.ShapeDtypeStruct((N, Cout, Lv), compute_dtype),
            jax.ShapeDtypeStruct((N, Cout, 1), jnp.float32),
            jax.ShapeDtypeStruct((N, Cout, 1), jnp.float32),
        ],
        compiler_params=pltpu.CompilerParams(
            dimension_semantics=("parallel",),   # megacore-splittable on v7x
            vmem_limit_bytes=40 * 1024 * 1024,   # headroom on v7x's 64 MiB VMEM
        ),
        cost_estimate=cost1,
    )(x_flat, w_taps, col_mask)

    # ---- finalize BatchNorm (biased batch stats), fold gamma/beta -----------
    tot_sum = jnp.sum(ch_sum, axis=0)                    # (Cout, 1)
    tot_sq = jnp.sum(ch_sq, axis=0)                      # (Cout, 1)
    mean = tot_sum / M
    var = jnp.maximum(tot_sq / M - mean * mean, 0.0)     # biased variance
    inv_std = jax.lax.rsqrt(var + BN_EPS)
    scale = (gamma.reshape(Cout, 1) * inv_std).reshape(Cout, 1, 1)
    shift = beta.reshape(Cout, 1, 1) - mean.reshape(Cout, 1, 1) * scale

    # ---- pass 2: fused BN affine + ReLU, writes NCHW directly ---------------
    conv_4d = conv_out.reshape(N, Cout, H, Wp)           # free (contiguous)
    cost2 = pl.CostEstimate(
        flops=3 * N * Cout * H * W,
        transcendentals=0,
        bytes_accessed=(N * Cout * H * Wp * in_bytes
                        + N * Cout * H * W * 4 + 2 * Cout * 4),
    )
    out = pl.pallas_call(
        functools.partial(bn_relu_kernel, W),
        grid=(N,),
        in_specs=[
            pl.BlockSpec((1, Cout, H, Wp), lambda n: (n, 0, 0, 0)),
            pl.BlockSpec((Cout, 1, 1), lambda n: (0, 0, 0)),     # resident
            pl.BlockSpec((Cout, 1, 1), lambda n: (0, 0, 0)),     # resident
        ],
        out_specs=pl.BlockSpec((1, Cout, H, W), lambda n: (n, 0, 0, 0)),
        out_shape=jax.ShapeDtypeStruct((N, Cout, H, W), jnp.float32),
        compiler_params=pltpu.CompilerParams(
            dimension_semantics=("parallel",),
            vmem_limit_bytes=40 * 1024 * 1024,
        ),
        cost_estimate=cost2,
    )(conv_4d, scale, shift)
    return out                                            # already NCHW


def reference_forward(x_nchw, w_hwio, bias, gamma, beta):
    x = jnp.transpose(x_nchw, (0, 2, 3, 1))
    y = jax.lax.conv_general_dilated(
        x, w_hwio, window_strides=(1, 1), padding=((1, 1), (1, 1)),
        dimension_numbers=("NHWC", "HWIO", "NHWC"),
    ) + bias
    mean = jnp.mean(y, axis=(0, 1, 2), keepdims=True)
    var = jnp.var(y, axis=(0, 1, 2), keepdims=True)
    y = (y - mean) * jax.lax.rsqrt(var + BN_EPS)
    y = y * gamma + beta
    y = jnp.maximum(y, 0.0)
    return jnp.transpose(y, (0, 3, 1, 2))


if __name__ == "__main__":
    # Small shapes consistent with the module: N=2, Cin=4, Cout=8, H=W=16.
    N, Cin, Cout, H, W = 2, 4, 8, 16, 16

    key = jax.random.PRNGKey(0)
    kx, kw, kb, kg, kbeta = jax.random.split(key, 5)

    x = jax.random.normal(kx, (N, Cin, H, W), dtype=jnp.float32)
    w_hwio = 0.1 * jax.random.normal(kw, (3, 3, Cin, Cout), dtype=jnp.float32)
    bias = 0.1 * jax.random.normal(kb, (Cout,), dtype=jnp.float32)
    gamma = 1.0 + 0.1 * jax.random.normal(kg, (Cout,), dtype=jnp.float32)
    beta = 0.1 * jax.random.normal(kbeta, (Cout,), dtype=jnp.float32)

    ref = jax.block_until_ready(reference_forward(x, w_hwio, bias, gamma, beta))

    # f32 path: tight check of the exact module semantics.
    fwd_f32 = jax.jit(functools.partial(conv_block_forward,
                                        compute_dtype=jnp.float32))
    out_f32 = jax.block_until_ready(fwd_f32(x, w_hwio, bias, gamma, beta))
    assert out_f32.shape == (N, Cout, H, W)
    err_f32 = float(jnp.max(jnp.abs(out_f32 - ref)))
    assert jnp.allclose(out_f32, ref, atol=1e-4, rtol=1e-4), err_f32

    # bf16 path (production config: bf16 MXU inputs + bf16 conv intermediate).
    fwd_bf16 = jax.jit(functools.partial(conv_block_forward,
                                         compute_dtype=jnp.bfloat16))
    out_bf16 = jax.block_until_ready(fwd_bf16(x, w_hwio, bias, gamma, beta))
    assert out_bf16.shape == (N, Cout, H, W)
    err_bf16 = float(jnp.max(jnp.abs(out_bf16 - ref)))
    assert jnp.allclose(out_bf16, ref, atol=5e-2, rtol=5e-2), err_bf16

    print("KERNEL_OK")
</pallas_src>

<mosaic_0001>
module attributes {stable_mosaic.version = 11 : i64} {
  func.func @conv_stats_kernel(%arg0: i32, %arg1: memref<1x4x342xf32, #tpu.memory_space<vmem>>, %arg2: memref<9x8x4xf32, #tpu.memory_space<vmem>>, %arg3: memref<1x288xf32, #tpu.memory_space<vmem>>, %arg4: memref<1x8x288xf32, #tpu.memory_space<vmem>>, %arg5: memref<1x8x1xf32, #tpu.memory_space<vmem>>, %arg6: memref<1x8x1xf32, #tpu.memory_space<vmem>>) attributes {dimension_semantics = [#tpu.dimension_semantics<parallel>], iteration_bounds = array<i64: 2>, scalar_prefetch = 0 : i64, scratch_operands = 0 : i64, tpu.core_type = #tpu.core_type<tc>, window_params = [{transform_indices = @transform_0, window_bounds = array<i64: 1, 4, 342>}, {pipeline_mode = #tpu.pipeline_mode<synchronous>, transform_indices = @transform_1, window_bounds = array<i64: 9, 8, 4>}, {pipeline_mode = #tpu.pipeline_mode<synchronous>, transform_indices = @transform_2, window_bounds = array<i64: 1, 288>}, {transform_indices = @transform_3, window_bounds = array<i64: 1, 8, 288>}, {transform_indices = @transform_4, window_bounds = array<i64: 1, 8, 1>}, {transform_indices = @transform_5, window_bounds = array<i64: 1, 8, 1>}]} {
    %c0 = arith.constant 0 : index
    %c0_0 = arith.constant 0 : index
    %c0_1 = arith.constant 0 : index
    %0 = vector.load %arg1[%c0, %c0_0, %c0_1] : memref<1x4x342xf32, #tpu.memory_space<vmem>>, vector<1x4x342xf32>
    %1 = vector.shape_cast %0 : vector<1x4x342xf32> to vector<4x342xf32>
    %cst = arith.constant 0.000000e+00 : f32
    %2 = vector.broadcast %cst : f32 to vector<8x288xf32>
    %c0_2 = arith.constant 0 : index
    %c0_3 = arith.constant 0 : index
    %c0_4 = arith.constant 0 : index
    %3 = vector.load %arg2[%c0_2, %c0_3, %c0_4] : memref<9x8x4xf32, #tpu.memory_space<vmem>>, vector<1x8x4xf32>
    %4 = vector.shape_cast %3 : vector<1x8x4xf32> to vector<8x4xf32>
    %5 = vector.extract_strided_slice %1 {offsets = [0, 0], sizes = [4, 288], strides = [1, 1]} : vector<4x342xf32> to vector<4x288xf32>
    %cst_5 = arith.constant dense<0.000000e+00> : vector<8x288xf32>
    %6 = tpu.matmul %4, %5, %cst_5 {dimension_numbers = #tpu.dot_dimension_numbers<[1], [0], [0], [1], [0, 0, 1, 1], [], []>} : vector<8x4xf32>, vector<4x288xf32>, vector<8x288xf32> -> vector<8x288xf32>
    %7 = arith.addf %2, %6 : vector<8x288xf32>
    %c1 = arith.constant 1 : index
    %c0_6 = arith.constant 0 : index
    %c0_7 = arith.constant 0 : index
    %8 = vector.load %arg2[%c1, %c0_6, %c0_7] : memref<9x8x4xf32, #tpu.memory_space<vmem>>, vector<1x8x4xf32>
    %9 = vector.shape_cast %8 : vector<1x8x4xf32> to vector<8x4xf32>
    %10 = vector.extract_strided_slice %1 {offsets = [0, 1], sizes = [4, 288], strides = [1, 1]} : vector<4x342xf32> to vector<4x288xf32>
    %cst_8 = arith.constant dense<0.000000e+00> : vector<8x288xf32>
    %11 = tpu.matmul %9, %10, %cst_8 {dimension_numbers = #tpu.dot_dimension_numbers<[1], [0], [0], [1], [0, 0, 1, 1], [], []>} : vector<8x4xf32>, vector<4x288xf32>, vector<8x288xf32> -> vector<8x288xf32>
    %12 = arith.addf %7, %11 : vector<8x288xf32>
    %c2 = arith.constant 2 : index
    %c0_9 = arith.constant 0 : index
    %c0_10 = arith.constant 0 : index
    %13 = vector.load %arg2[%c2, %c0_9, %c0_10] : memref<9x8x4xf32, #tpu.memory_space<vmem>>, vector<1x8x4xf32>
    %14 = vector.shape_cast %13 : vector<1x8x4xf32> to vector<8x4xf32>
    %15 = vector.extract_strided_slice %1 {offsets = [0, 2], sizes = [4, 288], strides = [1, 1]} : vector<4x342xf32> to vector<4x288xf32>
    %cst_11 = arith.constant dense<0.000000e+00> : vector<8x288xf32>
    %16 = tpu.matmul %14, %15, %cst_11 {dimension_numbers = #tpu.dot_dimension_numbers<[1], [0], [0], [1], [0, 0, 1, 1], [], []>} : vector<8x4xf32>, vector<4x288xf32>, vector<8x288xf32> -> vector<8x288xf32>
    %17 = arith.addf %12, %16 : vector<8x288xf32>
    %c3 = arith.constant 3 : index
    %c0_12 = arith.constant 0 : index
    %c0_13 = arith.constant 0 : index
    %18 = vector.load %arg2[%c3, %c0_12, %c0_13] : memref<9x8x4xf32, #tpu.memory_space<vmem>>, vector<1x8x4xf32>
    %19 = vector.shape_cast %18 : vector<1x8x4xf32> to vector<8x4xf32>
    %20 = vector.extract_strided_slice %1 {offsets = [0, 18], sizes = [4, 288], strides = [1, 1]} : vector<4x342xf32> to vector<4x288xf32>
    %cst_14 = arith.constant dense<0.000000e+00> : vector<8x288xf32>
    %21 = tpu.matmul %19, %20, %cst_14 {dimension_numbers = #tpu.dot_dimension_numbers<[1], [0], [0], [1], [0, 0, 1, 1], [], []>} : vector<8x4xf32>, vector<4x288xf32>, vector<8x288xf32> -> vector<8x288xf32>
    %22 = arith.addf %17, %21 : vector<8x288xf32>
    %c4 = arith.constant 4 : index
    %c0_15 = arith.constant 0 : index
    %c0_16 = arith.constant 0 : index
    %23 = vector.load %arg2[%c4, %c0_15, %c0_16] : memref<9x8x4xf32, #tpu.memory_space<vmem>>, vector<1x8x4xf32>
    %24 = vector.shape_cast %23 : vector<1x8x4xf32> to vector<8x4xf32>
    %25 = vector.extract_strided_slice %1 {offsets = [0, 19], sizes = [4, 288], strides = [1, 1]} : vector<4x342xf32> to vector<4x288xf32>
    %cst_17 = arith.constant dense<0.000000e+00> : vector<8x288xf32>
    %26 = tpu.matmul %24, %25, %cst_17 {dimension_numbers = #tpu.dot_dimension_numbers<[1], [0], [0], [1], [0, 0, 1, 1], [], []>} : vector<8x4xf32>, vector<4x288xf32>, vector<8x288xf32> -> vector<8x288xf32>
    %27 = arith.addf %22, %26 : vector<8x288xf32>
    %c5 = arith.constant 5 : index
    %c0_18 = arith.constant 0 : index
    %c0_19 = arith.constant 0 : index
    %28 = vector.load %arg2[%c5, %c0_18, %c0_19] : memref<9x8x4xf32, #tpu.memory_space<vmem>>, vector<1x8x4xf32>
    %29 = vector.shape_cast %28 : vector<1x8x4xf32> to vector<8x4xf32>
    %30 = vector.extract_strided_slice %1 {offsets = [0, 20], sizes = [4, 288], strides = [1, 1]} : vector<4x342xf32> to vector<4x288xf32>
    %cst_20 = arith.constant dense<0.000000e+00> : vector<8x288xf32>
    %31 = tpu.matmul %29, %30, %cst_20 {dimension_numbers = #tpu.dot_dimension_numbers<[1], [0], [0], [1], [0, 0, 1, 1], [], []>} : vector<8x4xf32>, vector<4x288xf32>, vector<8x288xf32> -> vector<8x288xf32>
    %32 = arith.addf %27, %31 : vector<8x288xf32>
    %c6 = arith.constant 6 : index
    %c0_21 = arith.constant 0 : index
    %c0_22 = arith.constant 0 : index
    %33 = vector.load %arg2[%c6, %c0_21, %c0_22] : memref<9x8x4xf32, #tpu.memory_space<vmem>>, vector<1x8x4xf32>
    %34 = vector.shape_cast %33 : vector<1x8x4xf32> to vector<8x4xf32>
    %35 = vector.extract_strided_slice %1 {offsets = [0, 36], sizes = [4, 288], strides = [1, 1]} : vector<4x342xf32> to vector<4x288xf32>
    %cst_23 = arith.constant dense<0.000000e+00> : vector<8x288xf32>
    %36 = tpu.matmul %34, %35, %cst_23 {dimension_numbers = #tpu.dot_dimension_numbers<[1], [0], [0], [1], [0, 0, 1, 1], [], []>} : vector<8x4xf32>, vector<4x288xf32>, vector<8x288xf32> -> vector<8x288xf32>
    %37 = arith.addf %32, %36 : vector<8x288xf32>
    %c7 = arith.constant 7 : index
    %c0_24 = arith.constant 0 : index
    %c0_25 = arith.constant 0 : index
    %38 = vector.load %arg2[%c7, %c0_24, %c0_25] : memref<9x8x4xf32, #tpu.memory_space<vmem>>, vector<1x8x4xf32>
    %39 = vector.shape_cast %38 : vector<1x8x4xf32> to vector<8x4xf32>
    %40 = vector.extract_strided_slice %1 {offsets = [0, 37], sizes = [4, 288], strides = [1, 1]} : vector<4x342xf32> to vector<4x288xf32>
    %cst_26 = arith.constant dense<0.000000e+00> : vector<8x288xf32>
    %41 = tpu.matmul %39, %40, %cst_26 {dimension_numbers = #tpu.dot_dimension_numbers<[1], [0], [0], [1], [0, 0, 1, 1], [], []>} : vector<8x4xf32>, vector<4x288xf32>, vector<8x288xf32> -> vector<8x288xf32>
    %42 = arith.addf %37, %41 : vector<8x288xf32>
    %c8 = arith.constant 8 : index
    %c0_27 = arith.constant 0 : index
    %c0_28 = arith.constant 0 : index
    %43 = vector.load %arg2[%c8, %c0_27, %c0_28] : memref<9x8x4xf32, #tpu.memory_space<vmem>>, vector<1x8x4xf32>
    %44 = vector.shape_cast %43 : vector<1x8x4xf32> to vector<8x4xf32>
    %45 = vector.extract_strided_slice %1 {offsets = [0, 38], sizes = [4, 288], strides = [1, 1]} : vector<4x342xf32> to vector<4x288xf32>
    %cst_29 = arith.constant dense<0.000000e+00> : vector<8x288xf32>
    %46 = tpu.matmul %44, %45, %cst_29 {dimension_numbers = #tpu.dot_dimension_numbers<[1], [0], [0], [1], [0, 0, 1, 1], [], []>} : vector<8x4xf32>, vector<4x288xf32>, vector<8x288xf32> -> vector<8x288xf32>
    %47 = arith.addf %42, %46 : vector<8x288xf32>
    %c0_30 = arith.constant 0 : index
    %c0_31 = arith.constant 0 : index
    %48 = vector.load %arg3[%c0_30, %c0_31] : memref<1x288xf32, #tpu.memory_space<vmem>>, vector<1x288xf32>
    %49 = vector.broadcast %48 : vector<1x288xf32> to vector<8x288xf32>
    %50 = arith.mulf %47, %49 : vector<8x288xf32>
    %c0_32 = arith.constant 0 : index
    %c0_33 = arith.constant 0 : index
    %c0_34 = arith.constant 0 : index
    %51 = vector.load %arg4[%c0_32, %c0_33, %c0_34] : memref<1x8x288xf32, #tpu.memory_space<vmem>>, vector<1x8x288xf32>
    %52 = vector.shape_cast %51 : vector<1x8x288xf32> to vector<8x288xf32>
    %53 = vector.shape_cast %50 : vector<8x288xf32> to vector<1x8x288xf32>
    tpu.vector_store %arg4[%c0_32, %c0_33, %c0_34], %53 {strides = array<i32>} : memref<1x8x288xf32, #tpu.memory_space<vmem>>, vector<1x8x288xf32>,
    %cst_35 = arith.constant dense<0.000000e+00> : vector<8xf32>
    %54 = vector.multi_reduction <add>, %50, %cst_35 [1] : vector<8x288xf32> to vector<8xf32>
    %55 = vector.shape_cast %54 : vector<8xf32> to vector<8x1xf32>
    %c0_36 = arith.constant 0 : index
    %c0_37 = arith.constant 0 : index
    %c0_38 = arith.constant 0 : index
    %56 = vector.load %arg5[%c0_36, %c0_37, %c0_38] : memref<1x8x1xf32, #tpu.memory_space<vmem>>, vector<1x8x1xf32>
    %57 = vector.shape_cast %56 : vector<1x8x1xf32> to vector<8x1xf32>
    %58 = vector.shape_cast %55 : vector<8x1xf32> to vector<1x8x1xf32>
    tpu.vector_store %arg5[%c0_36, %c0_37, %c0_38], %58 {strides = array<i32>} : memref<1x8x1xf32, #tpu.memory_space<vmem>>, vector<1x8x1xf32>,
    %59 = arith.mulf %50, %50 : vector<8x288xf32>
    %cst_39 = arith.constant dense<0.000000e+00> : vector<8xf32>
    %60 = vector.multi_reduction <add>, %59, %cst_39 [1] : vector<8x288xf32> to vector<8xf32>
    %61 = vector.shape_cast %60 : vector<8xf32> to vector<8x1xf32>
    %c0_40 = arith.constant 0 : index
    %c0_41 = arith.constant 0 : index
    %c0_42 = arith.constant 0 : index
    %62 = vector.load %arg6[%c0_40, %c0_41, %c0_42] : memref<1x8x1xf32, #tpu.memory_space<vmem>>, vector<1x8x1xf32>
    %63 = vector.shape_cast %62 : vector<1x8x1xf32> to vector<8x1xf32>
    %64 = vector.shape_cast %61 : vector<8x1xf32> to vector<1x8x1xf32>
    tpu.vector_store %arg6[%c0_40, %c0_41, %c0_42], %64 {strides = array<i32>} : memref<1x8x1xf32, #tpu.memory_space<vmem>>, vector<1x8x1xf32>,
    return
  }
  func.func @transform_0(%arg0: i32) -> (i32, i32, i32) {
    %c0_i32 = arith.constant 0 : i32
    %c0_i32_0 = arith.constant 0 : i32
    %c0_i32_1 = arith.constant 0 : i32
    return %arg0, %c0_i32, %c0_i32_0 : i32, i32, i32
  }
  func.func @transform_1(%arg0: i32) -> (i32, i32, i32) {
    %c0_i32 = arith.constant 0 : i32
    %c0_i32_0 = arith.constant 0 : i32
    %c0_i32_1 = arith.constant 0 : i32
    %c0_i32_2 = arith.constant 0 : i32
    return %c0_i32, %c0_i32_0, %c0_i32_1 : i32, i32, i32
  }
  func.func @transform_2(%arg0: i32) -> (i32, i32) {
    %c0_i32 = arith.constant 0 : i32
    %c0_i32_0 = arith.constant 0 : i32
    %c0_i32_1 = arith.constant 0 : i32
    return %c0_i32, %c0_i32_0 : i32, i32
  }
  func.func @transform_3(%arg0: i32) -> (i32, i32, i32) {
    %c0_i32 = arith.constant 0 : i32
    %c0_i32_0 = arith.constant 0 : i32
    %c0_i32_1 = arith.constant 0 : i32
    return %arg0, %c0_i32, %c0_i32_0 : i32, i32, i32
  }
  func.func @transform_4(%arg0: i32) -> (i32, i32, i32) {
    %c0_i32 = arith.constant 0 : i32
    %c0_i32_0 = arith.constant 0 : i32
    %c0_i32_1 = arith.constant 0 : i32
    return %arg0, %c0_i32, %c0_i32_0 : i32, i32, i32
  }
  func.func @transform_5(%arg0: i32) -> (i32, i32, i32) {
    %c0_i32 = arith.constant 0 : i32
    %c0_i32_0 = arith.constant 0 : i32
    %c0_i32_1 = arith.constant 0 : i32
    return %arg0, %c0_i32, %c0_i32_0 : i32, i32, i32
  }
}

module attributes {stable_mosaic.version = 11 : i64} {
  func.func @bn_relu_kernel(%arg0: i32, %arg1: memref<1x8x16x18xf32, #tpu.memory_space<vmem>>, %arg2: memref<8x1x1xf32, #tpu.memory_space<vmem>>, %arg3: memref<8x1x1xf32, #tpu.memory_space<vmem>>, %arg4: memref<1x8x16x16xf32, #tpu.memory_space<vmem>>) attributes {dimension_semantics = [#tpu.dimension_semantics<parallel>], iteration_bounds = array<i64: 2>, scalar_prefetch = 0 : i64, scratch_operands = 0 : i64, tpu.core_type = #tpu.core_type<tc>, window_params = [{transform_indices = @transform_0, window_bounds = array<i64: 1, 8, 16, 18>}, {pipeline_mode = #tpu.pipeline_mode<synchronous>, transform_indices = @transform_1, window_bounds = array<i64: 8, 1, 1>}, {pipeline_mode = #tpu.pipeline_mode<synchronous>, transform_indices = @transform_2, window_bounds = array<i64: 8, 1, 1>}, {transform_indices = @transform_3, window_bounds = array<i64: 1, 8, 16, 16>}]} {
    %c0 = arith.constant 0 : index
    %c0_0 = arith.constant 0 : index
    %c0_1 = arith.constant 0 : index
    %c0_2 = arith.constant 0 : index
    %0 = vector.load %arg1[%c0, %c0_0, %c0_1, %c0_2] : memref<1x8x16x18xf32, #tpu.memory_space<vmem>>, vector<1x8x16x18xf32>
    %1 = vector.shape_cast %0 : vector<1x8x16x18xf32> to vector<8x16x18xf32>
    %2 = vector.extract_strided_slice %1 {offsets = [0, 0, 0], sizes = [8, 16, 16], strides = [1, 1, 1]} : vector<8x16x18xf32> to vector<8x16x16xf32>
    %c0_3 = arith.constant 0 : index
    %c0_4 = arith.constant 0 : index
    %c0_5 = arith.constant 0 : index
    %3 = vector.load %arg2[%c0_3, %c0_4, %c0_5] : memref<8x1x1xf32, #tpu.memory_space<vmem>>, vector<8x1x1xf32>
    %4 = vector.broadcast %3 : vector<8x1x1xf32> to vector<8x16x16xf32>
    %5 = arith.mulf %2, %4 : vector<8x16x16xf32>
    %c0_6 = arith.constant 0 : index
    %c0_7 = arith.constant 0 : index
    %c0_8 = arith.constant 0 : index
    %6 = vector.load %arg3[%c0_6, %c0_7, %c0_8] : memref<8x1x1xf32, #tpu.memory_space<vmem>>, vector<8x1x1xf32>
    %7 = vector.broadcast %6 : vector<8x1x1xf32> to vector<8x16x16xf32>
    %8 = arith.addf %5, %7 : vector<8x16x16xf32>
    %cst = arith.constant 0.000000e+00 : f32
    %9 = vector.broadcast %cst : f32 to vector<8x16x16xf32>
    %10 = arith.maximumf %8, %9 : vector<8x16x16xf32>
    %c0_9 = arith.constant 0 : index
    %c0_10 = arith.constant 0 : index
    %c0_11 = arith.constant 0 : index
    %c0_12 = arith.constant 0 : index
    %11 = vector.load %arg4[%c0_9, %c0_10, %c0_11, %c0_12] : memref<1x8x16x16xf32, #tpu.memory_space<vmem>>, vector<1x8x16x16xf32>
    %12 = vector.shape_cast %11 : vector<1x8x16x16xf32> to vector<8x16x16xf32>
    %13 = vector.shape_cast %10 : vector<8x16x16xf32> to vector<1x8x16x16xf32>
    tpu.vector_store %arg4[%c0_9, %c0_10, %c0_11, %c0_12], %13 {strides = array<i32>} : memref<1x8x16x16xf32, #tpu.memory_space<vmem>>, vector<1x8x16x16xf32>,
    return
  }
  func.func @transform_0(%arg0: i32) -> (i32, i32, i32, i32) {
    %c0_i32 = arith.constant 0 : i32
    %c0_i32_0 = arith.constant 0 : i32
    %c0_i32_1 = arith.constant 0 : i32
    %c0_i32_2 = arith.constant 0 : i32
    return %arg0, %c0_i32, %c0_i32_0, %c0_i32_1 : i32, i32, i32, i32
  }
  func.func @transform_1(%arg0: i32) -> (i32, i32, i32) {
    %c0_i32 = arith.constant 0 : i32
    %c0_i32_0 = arith.constant 0 : i32
    %c0_i32_1 = arith.constant 0 : i32
    %c0_i32_2 = arith.constant 0 : i32
    return %c0_i32, %c0_i32_0, %c0_i32_1 : i32, i32, i32
  }
  func.func @transform_2(%arg0: i32) -> (i32, i32, i32) {
    %c0_i32 = arith.constant 0 : i32
    %c0_i32_0 = arith.constant 0 : i32
    %c0_i32_1 = arith.constant 0 : i32
    %c0_i32_2 = arith.constant 0 : i32
    return %c0_i32, %c0_i32_0, %c0_i32_1 : i32, i32, i32
  }
  func.func @transform_3(%arg0: i32) -> (i32, i32, i32, i32) {
    %c0_i32 = arith.constant 0 : i32
    %c0_i32_0 = arith.constant 0 : i32
    %c0_i32_1 = arith.constant 0 : i32
    %c0_i32_2 = arith.constant 0 : i32
    return %arg0, %c0_i32, %c0_i32_0, %c0_i32_1 : i32, i32, i32, i32
  }
}

</mosaic_0001>

<llo_original>
// kernel: conv_block_forward.3
$region0: #{conv_block_forward.3}
  #allocation0 [shape = 'u32[]', space=smem, size = 0x4, offset = 0x4, fixed_abs, tag = 'smem constant byte address 0x4 - core index']
  #allocation1 [shape = 'u32[72,128]{1,0:T(1,128)}', space=vmem, size = 0x9000, scoped, tag = 'internal scratch']
  %s0 = inlined_call_operand.vmem [shape: f32[2,8,16,18], index: 0, kind: input, shape index: {}]
  %s1 = inlined_call_operand.vmem [shape: f32[8,1,1], index: 1, kind: input, shape index: {}]
  %s2 = inlined_call_operand.vmem [shape: f32[8,1,1], index: 2, kind: input, shape index: {}]
  %s3 = inlined_call_operand.hbm [shape: f32[2,8,16,16], index: 3, kind: output, shape index: {}]
  %s4 = sld [smem:[#allocation0]]
  $region45: #{conv_block_forward.3} parent=0
    _
  %s6 = ssub.s32 1, %s4
  %s7 = scalar_select 0, %s6, %s4
  $region1: #{conv_block_forward.3} parent=0
    #allocation2 [shape = 'u8[131072]{0}', space=vmem, size = 0x20000, scoped, tag = 'output window, operand 0']
    #allocation3 [shape = 's32[2]{0}', space=sflag, size = 0x8, scoped, tag = 'scoped memory for conv_block_forward.3']
    %8 = vsyncpa [#allocation3], 0
    %s9 = scalar_lea.sflag [#allocation3], 1
    %10 = vsyncpa %s9, 0
    loop: start=0, step=1, limit=4
    $region2: #{conv_block_forward.3} parent=1 // loop_pre_header
      _
    $region3: #{conv_block_forward.3} parent=1 // loop_header
      %s12 = sphi 0, %s16
      %p13 = scmp.ge.s32.totalorder %s12, 4
      %s22 = sphi 0, %s24
      %s25 = sphi 0, %s22
      %s26 = sphi 0, %s25
      %s42 = sphi 0, %s26
      %s46 = sphi 0, %s46
      %s48 = sphi 0, %s46
      %s49 = sphi 0, %s48
      %s63 = sphi 0, %s49
      %s67 = sphi 0, %s67
      %s69 = sphi 0, %s67
      %s70 = sphi 0, %s69
      %s84 = sphi 0, %s70
      %s90 = sphi 0, %s92
      %s93 = sphi 0, %s90
      %s94 = sphi 0, %s93
      %s110 = sphi 0, %s94
    $region4: #{conv_block_forward.3} parent=1 // loop_header_branch
      %15 = sbr.rel (%p13) target = $region8
    $region5: #{conv_block_forward.3} parent=1 // loop_body
      %s17 = ssub.s32 %s12, 1
      %s18 = ssub.s32 %s12, 2
      %s19 = sadd.s32 %s12, 1
      %s20 = ssub.s32 %s12, %s19
      %p21 = scmp.eq.s32.totalorder %s20, 0
      %s23 = sadd.s32 %s22, 1
      %s24 = scalar_select %p21, %s22, %s23
      %p27 = pneg %p21
      %p28 = scmp.eq.s32.totalorder %s12, 1
      %p29 = por %p27, %p28
      %p30 = scmp.ne.s32.totalorder %s22, %s25
      %p31 = scmp.eq.s32.totalorder %s12, 0
      %p32 = por %p30, %p31
      %p33 = scmp.ne.s32.totalorder %s22, %s25
      %p34 = scmp.eq.s32.totalorder %s17, 1
      %p35 = por %p33, %p34
      %p36 = scmp.ne.s32.totalorder %s25, %s26
      %p37 = scmp.eq.s32.totalorder %s17, 0
      %p38 = por %p36, %p37
      %p39 = scmp.ne.s32.totalorder %s25, %s26
      %p40 = scmp.eq.s32.totalorder %s18, 1
      %p41 = por %p39, %p40
      %p43 = scmp.ne.s32.totalorder %s26, %s42
      %p44 = scmp.eq.s32.totalorder %s18, 0
      %p45 = por %p43, %p44
      %s47 = sadd.s32 %s46, 1
      %p50 = scmp.eq.s32.totalorder %s12, 1
      %p51 = scmp.ne.s32.totalorder %s46, %s48
      %p52 = scmp.eq.s32.totalorder %s12, 0
      %p53 = por %p51, %p52
      %p54 = scmp.ne.s32.totalorder %s46, %s48
      %p55 = scmp.eq.s32.totalorder %s17, 1
      %p56 = por %p54, %p55
      %p57 = scmp.ne.s32.totalorder %s48, %s49
      %p58 = scmp.eq.s32.totalorder %s17, 0
      %p59 = por %p57, %p58
      %p60 = scmp.ne.s32.totalorder %s48, %s49
      %p61 = scmp.eq.s32.totalorder %s18, 1
      %p62 = por %p60, %p61
      %p64 = scmp.ne.s32.totalorder %s49, %s63
      %p65 = scmp.eq.s32.totalorder %s18, 0
      %p66 = por %p64, %p65
      %s68 = sadd.s32 %s67, 1
      %p71 = scmp.eq.s32.totalorder %s12, 1
      %p72 = scmp.ne.s32.totalorder %s67, %s69
      %p73 = scmp.eq.s32.totalorder %s12, 0
      %p74 = por %p72, %p73
      %p75 = scmp.ne.s32.totalorder %s67, %s69
      %p76 = scmp.eq.s32.totalorder %s17, 1
      %p77 = por %p75, %p76
      %p78 = scmp.ne.s32.totalorder %s69, %s70
      %p79 = scmp.eq.s32.totalorder %s17, 0
      %p80 = por %p78, %p79
      %p81 = scmp.ne.s32.totalorder %s69, %s70
      %p82 = scmp.eq.s32.totalorder %s18, 1
      %p83 = por %p81, %p82
      %p85 = scmp.ne.s32.totalorder %s70, %s84
      %p86 = scmp.eq.s32.totalorder %s18, 0
      %p87 = por %p85, %p86
      %s88 = ssub.s32 %s12, %s19
      %p89 = scmp.eq.s32.totalorder %s88, 0
      %s91 = sadd.s32 %s90, 1
      %s92 = scalar_select %p89, %s90, %s91
      %p95 = pneg %p89
      %p96 = scmp.eq.s32.totalorder %s12, 1
      %p97 = por %p95, %p96
      %p98 = scmp.ne.s32.totalorder %s90, %s93
      %p99 = scmp.eq.s32.totalorder %s12, 0
      %p100 = por %p98, %p99
      %p101 = scmp.ne.s32.totalorder %s90, %s93
      %p102 = scmp.eq.s32.totalorder %s17, 1
      %p103 = por %p101, %p102
      %p104 = scmp.ne.s32.totalorder %s93, %s94
      %p105 = scmp.eq.s32.totalorder %s17, 0
      %p106 = por %p104, %p105
      %p107 = scmp.ne.s32.totalorder %s93, %s94
      %p108 = scmp.eq.s32.totalorder %s18, 1
      %p109 = por %p107, %p108
      %p111 = scmp.ne.s32.totalorder %s94, %s110
      %p112 = scmp.eq.s32.totalorder %s18, 0
      %p113 = por %p111, %p112
      %p114 = scmp.le.s32.totalorder 1, %s12
      %p115 = scmp.lt.s32.totalorder %s12, 3
      %p116 = pnand %p114, %p115
      %p117 = pneg %p116
      // Predicated region
      $region9: #{conv_block_forward.3} parent=5 // pred_check
        _
      $region10: #{conv_block_forward.3} parent=5 // pred_check_branch
        %119 = sbr.rel (%p116) target = $region12
      $region11: #{conv_block_forward.3} parent=5 // pred_region
        %s120 = ssub.s32 %s12, 1
        // Predicated region
        $region13: #{conv_block_forward.3} parent=11 // pred_check
          %p121 = pneg %p59
        $region14: #{conv_block_forward.3} parent=11 // pred_check_branch
          %123 = sbr.rel (%p121) target = $region16
        $region15: #{conv_block_forward.3} parent=11 // pred_region
          _
        $region16: #{conv_block_forward.3} parent=11 // pred_fallthru
          _
        // Predicated region
        $region17: #{conv_block_forward.3} parent=11 // pred_check
          %p124 = pneg %p80
        $region18: #{conv_block_forward.3} parent=11 // pred_check_branch
          %126 = sbr.rel (%p124) target = $region20
        $region19: #{conv_block_forward.3} parent=11 // pred_region
          _
        $region20: #{conv_block_forward.3} parent=11 // pred_fallthru
          _
      $region12: #{conv_block_forward.3} parent=5 // pred_fallthru
        _
      %p127 = scmp.lt.s32.totalorder %s12, 2
      // Predicated region
      $region21: #{conv_block_forward.3} parent=5 // pred_check
        %p128 = pneg %p127
      $region22: #{conv_block_forward.3} parent=5 // pred_check_branch
        %130 = sbr.rel (%p128) target = $region24
      $region23: #{conv_block_forward.3} parent=5 // pred_region
        // Predicated region
        $region25: #{conv_block_forward.3} parent=23 // pred_check
          %p131 = pneg %p32
        $region26: #{conv_block_forward.3} parent=23 // pred_check_branch
          %133 = sbr.rel (%p131) target = $region28
        $region27: #{conv_block_forward.3} parent=23 // pred_region
          %p134 = scmp.lt.s32.totalorder %s12, 1
          %s135 = scalar_select %p134, %s12, 1
          %s136 = smul.addr %s135, 16
          %s137 = smul.addr %s136, 8
          %s138 = scalar_lea.vmem %s0, %s137
        $region28: #{conv_block_forward.3} parent=23 // pred_fallthru
          _
      $region24: #{conv_block_forward.3} parent=5 // pred_fallthru
        _
      %p139 = scmp.le.s32.totalorder 1, %s12
      %p140 = scmp.lt.s32.totalorder %s12, 3
      %p141 = pnand %p139, %p140
      %p142 = pneg %p141
      // Predicated region
      $region29: #{conv_block_forward.3} parent=5 // pred_check
        _
      $region30: #{conv_block_forward.3} parent=5 // pred_check_branch
        %144 = sbr.rel (%p141) target = $region32
      $region31: #{conv_block_forward.3} parent=5 // pred_region
        %s145 = ssub.s32 %s12, 1
        %p146 = scmp.lt.s32.totalorder %s17, 1
        %s147 = scalar_select %p146, %s17, 1
        %s148 = smul.addr %s147, 16
        %s149 = smul.addr %s148, 8
        %s150 = scalar_lea.vmem %s0, %s149
        %p151 = pneg %p38
        %p152 = pneg %p35
        %p153 = pneg %p59
        %p154 = pneg %p56
        %p155 = pneg %p80
        %p156 = pneg %p77
        %p157 = pneg %p106
        %p158 = pneg %p103
        %s159 = sand.u32 %s93, 1
        %s160 = scalar_lea.sflag [#allocation3], %s159
        %s161 = sand.u32 %s93, 1
        %s162 = smul.addr %s161, 128
        %s163 = scalar_lea.vmem [#allocation2], %s162
        %p164 = scmp.lt.s32.totalorder %s17, 1
        %s165 = scalar_select %p164, %s17, 1
        %s166 = smul.addr %s165, 16
        %s167 = smul.addr %s166, 8
        %s168 = scalar_lea.vmem %s0, %s167
        %v169 = vld [vmem:[%s168] sm:$0xff]
        %v170 = vld [vmem:[%s168 + $0x8] sm:$0xff]
        %v171 = vld [vmem:[%s168 + $0x10] sm:$0xff]
        %v172 = vld [vmem:[%s168 + $0x18] sm:$0xff]
        %v173 = vld [vmem:[%s168 + $0x20] sm:$0xff]
        %v174 = vld [vmem:[%s168 + $0x28] sm:$0xff]
        %v175 = vld [vmem:[%s168 + $0x30] sm:$0xff]
        %v176 = vld [vmem:[%s168 + $0x38] sm:$0xff]
        %v177 = vld [vmem:[%s168 + $0x40] sm:$0xff]
        %v178 = vld [vmem:[%s168 + $0x48] sm:$0xff]
        %v179 = vld [vmem:[%s168 + $0x50] sm:$0xff]
        %v180 = vld [vmem:[%s168 + $0x58] sm:$0xff]
        %v181 = vld [vmem:[%s168 + $0x60] sm:$0xff]
        %v182 = vld [vmem:[%s168 + $0x68] sm:$0xff]
        %v183 = vld [vmem:[%s168 + $0x70] sm:$0xff]
        %v184 = vld [vmem:[%s168 + $0x78] sm:$0xff]
        %v185 = vld [vmem:[%s1] sm:$0x1]
        %v186 = vld [vmem:[%s1 + $0x1] sm:$0x1]
        %v187 = vld [vmem:[%s1 + $0x2] sm:$0x1]
        %v188 = vld [vmem:[%s1 + $0x3] sm:$0x1]
        %v189 = vld [vmem:[%s1 + $0x4] sm:$0x1]
        %v190 = vld [vmem:[%s1 + $0x5] sm:$0x1]
        %v191 = vld [vmem:[%s1 + $0x6] sm:$0x1]
        %v192 = vld [vmem:[%s1 + $0x7] sm:$0x1]
        %v201 = vperm.slane %v185, 0
        %v202 = vperm.slane %v186, 0
        %v203 = vperm.slane %v187, 0
        %v204 = vperm.slane %v188, 0
        %v205 = vperm.slane %v189, 0
        %v206 = vperm.slane %v190, 0
        %v207 = vperm.slane %v191, 0
        %v208 = vperm.slane %v192, 0
        %209 = vset.pattern.permute.xlu0 0
        %210 = vperm.xlu0 %209, %v201
        %v211 = vpop.permute.xlu0 %210
        %213 = vset.pattern.permute.xlu0 0
        %214 = vperm.xlu0 %213, %v202
        %v215 = vpop.permute.xlu0 %214
        %217 = vset.pattern.permute.xlu0 0
        %218 = vperm.xlu0 %217, %v203
        %v219 = vpop.permute.xlu0 %218
        %221 = vset.pattern.permute.xlu0 0
        %222 = vperm.xlu0 %221, %v204
        %v223 = vpop.permute.xlu0 %222
        %225 = vset.pattern.permute.xlu0 0
        %226 = vperm.xlu0 %225, %v205
        %v227 = vpop.permute.xlu0 %226
        %229 = vset.pattern.permute.xlu0 0
        %230 = vperm.xlu0 %229, %v206
        %v231 = vpop.permute.xlu0 %230
        %233 = vset.pattern.permute.xlu0 0
        %234 = vperm.xlu0 %233, %v207
        %v235 = vpop.permute.xlu0 %234
        %237 = vset.pattern.permute.xlu0 0
        %238 = vperm.xlu0 %237, %v208
        %v239 = vpop.permute.xlu0 %238
        %v241 = vmul.f32 %v169, %v211
        %v242 = vmul.f32 %v170, %v211
        %v243 = vmul.f32 %v171, %v215
        %v244 = vmul.f32 %v172, %v215
        %v245 = vmul.f32 %v173, %v219
        %v246 = vmul.f32 %v174, %v219
        %v247 = vmul.f32 %v175, %v223
        %v248 = vmul.f32 %v176, %v223
        %v249 = vmul.f32 %v177, %v227
        %v250 = vmul.f32 %v178, %v227
        %v251 = vmul.f32 %v179, %v231
        %v252 = vmul.f32 %v180, %v231
        %v253 = vmul.f32 %v181, %v235
        %v254 = vmul.f32 %v182, %v235
        %v255 = vmul.f32 %v183, %v239
        %v256 = vmul.f32 %v184, %v239
        %v257 = vld [vmem:[%s2] sm:$0x1]
        %v258 = vld [vmem:[%s2 + $0x1] sm:$0x1]
        %v259 = vld [vmem:[%s2 + $0x2] sm:$0x1]
        %v260 = vld [vmem:[%s2 + $0x3] sm:$0x1]
        %v261 = vld [vmem:[%s2 + $0x4] sm:$0x1]
        %v262 = vld [vmem:[%s2 + $0x5] sm:$0x1]
        %v263 = vld [vmem:[%s2 + $0x6] sm:$0x1]
        %v264 = vld [vmem:[%s2 + $0x7] sm:$0x1]
        %v273 = vperm.slane %v257, 0
        %v274 = vperm.slane %v258, 0
        %v275 = vperm.slane %v259, 0
        %v276 = vperm.slane %v260, 0
        %v277 = vperm.slane %v261, 0
        %v278 = vperm.slane %v262, 0
        %v279 = vperm.slane %v263, 0
        %v280 = vperm.slane %v264, 0
        %281 = vset.pattern.permute.xlu0 0
        %282 = vperm.xlu0 %281, %v273
        %v283 = vpop.permute.xlu0 %282
        %285 = vset.pattern.permute.xlu0 0
        %286 = vperm.xlu0 %285, %v274
        %v287 = vpop.permute.xlu0 %286
        %289 = vset.pattern.permute.xlu0 0
        %290 = vperm.xlu0 %289, %v275
        %v291 = vpop.permute.xlu0 %290
        %293 = vset.pattern.permute.xlu0 0
        %294 = vperm.xlu0 %293, %v276
        %v295 = vpop.permute.xlu0 %294
        %297 = vset.pattern.permute.xlu0 0
        %298 = vperm.xlu0 %297, %v277
        %v299 = vpop.permute.xlu0 %298
        %301 = vset.pattern.permute.xlu0 0
        %302 = vperm.xlu0 %301, %v278
        %v303 = vpop.permute.xlu0 %302
        %305 = vset.pattern.permute.xlu0 0
        %306 = vperm.xlu0 %305, %v279
        %v307 = vpop.permute.xlu0 %306
        %309 = vset.pattern.permute.xlu0 0
        %310 = vperm.xlu0 %309, %v280
        %v311 = vpop.permute.xlu0 %310
        %v313 = vadd.f32 %v241, %v283
        %v314 = vadd.f32 %v242, %v283
        %v315 = vadd.f32 %v243, %v287
        %v316 = vadd.f32 %v244, %v287
        %v317 = vadd.f32 %v245, %v291
        %v318 = vadd.f32 %v246, %v291
        %v319 = vadd.f32 %v247, %v295
        %v320 = vadd.f32 %v248, %v295
        %v321 = vadd.f32 %v249, %v299
        %v322 = vadd.f32 %v250, %v299
        %v323 = vadd.f32 %v251, %v303
        %v324 = vadd.f32 %v252, %v303
        %v325 = vadd.f32 %v253, %v307
        %v326 = vadd.f32 %v254, %v307
        %v327 = vadd.f32 %v255, %v311
        %v328 = vadd.f32 %v256, %v311
        %v329 = vmax.f32 %v313, 0.0
        %v330 = vmax.f32 %v314, 0.0
        %v331 = vmax.f32 %v315, 0.0
        %v332 = vmax.f32 %v316, 0.0
        %v333 = vmax.f32 %v317, 0.0
        %v334 = vmax.f32 %v318, 0.0
        %v335 = vmax.f32 %v319, 0.0
        %v336 = vmax.f32 %v320, 0.0
        %v337 = vmax.f32 %v321, 0.0
        %v338 = vmax.f32 %v322, 0.0
        %v339 = vmax.f32 %v323, 0.0
        %v340 = vmax.f32 %v324, 0.0
        %v341 = vmax.f32 %v325, 0.0
        %v342 = vmax.f32 %v326, 0.0
        %v343 = vmax.f32 %v327, 0.0
        %v344 = vmax.f32 %v328, 0.0
        %vm345 = vcmask 130048
        %346 = vst.msk [vmem:[%s163] sm:$0xff] %vm345, %v329
        %347 = vst.msk [vmem:[%s163 + $0x8] sm:$0xff] %vm345, %v330
        %348 = vst.msk [vmem:[%s163 + $0x10] sm:$0xff] %vm345, %v331
        %349 = vst.msk [vmem:[%s163 + $0x18] sm:$0xff] %vm345, %v332
        %350 = vst.msk [vmem:[%s163 + $0x20] sm:$0xff] %vm345, %v333
        %351 = vst.msk [vmem:[%s163 + $0x28] sm:$0xff] %vm345, %v334
        %352 = vst.msk [vmem:[%s163 + $0x30] sm:$0xff] %vm345, %v335
        %353 = vst.msk [vmem:[%s163 + $0x38] sm:$0xff] %vm345, %v336
        %354 = vst.msk [vmem:[%s163 + $0x40] sm:$0xff] %vm345, %v337
        %355 = vst.msk [vmem:[%s163 + $0x48] sm:$0xff] %vm345, %v338
        %356 = vst.msk [vmem:[%s163 + $0x50] sm:$0xff] %vm345, %v339
        %357 = vst.msk [vmem:[%s163 + $0x58] sm:$0xff] %vm345, %v340
        %358 = vst.msk [vmem:[%s163 + $0x60] sm:$0xff] %vm345, %v341
        %359 = vst.msk [vmem:[%s163 + $0x68] sm:$0xff] %vm345, %v342
        %360 = vst.msk [vmem:[%s163 + $0x70] sm:$0xff] %vm345, %v343
        %361 = vst.msk [vmem:[%s163 + $0x78] sm:$0xff] %vm345, %v344
        %s362 = sand.u32 %s93, 1
        %s363 = scalar_lea.sflag [#allocation3], %s362
        %s364 = sand.u32 %s93, 1
        %s365 = smul.addr %s364, 128
        %s366 = scalar_lea.vmem [#allocation2], %s365
        // Predicated region
        $region33: #{conv_block_forward.3} parent=31 // pred_check
          %p367 = pneg %p103
        $region34: #{conv_block_forward.3} parent=31 // pred_check_branch
          %369 = sbr.rel (%p367) target = $region36
        $region35: #{conv_block_forward.3} parent=31 // pred_region
          %371 = vsyncadd %s363, 0
          %s372 = smul.addr %s17, 16
          %s373 = smul.addr %s372, 8
          %s374 = scalar_lea.hbm %s3, %s373
          %s375 = sshll.u32 %s366, 4
          %s376 = int_to_ptr.vmem [resolvable:$true] %s375
          %s377 = sshll.u32 %s374, 4
          %s378 = int_to_ptr.hbm [resolvable:$true] %s377
          %383 = dma.vmem_to_hbm [thread:$0]  %s376, 2048, %s378, %s363, 128, 128, 8
        $region36: #{conv_block_forward.3} parent=31 // pred_fallthru
          _
      $region32: #{conv_block_forward.3} parent=5 // pred_fallthru
        _
      %p384 = scmp.le.s32.totalorder 2, %s12
      // Predicated region
      $region37: #{conv_block_forward.3} parent=5 // pred_check
        %p385 = pneg %p384
      $region38: #{conv_block_forward.3} parent=5 // pred_check_branch
        %387 = sbr.rel (%p385) target = $region40
      $region39: #{conv_block_forward.3} parent=5 // pred_region
        %s388 = ssub.s32 %s12, 2
        // Predicated region
        $region41: #{conv_block_forward.3} parent=39 // pred_check
          %p389 = pneg %p109
        $region42: #{conv_block_forward.3} parent=39 // pred_check_branch
          %391 = sbr.rel (%p389) target = $region44
        $region43: #{conv_block_forward.3} parent=39 // pred_region
          %s392 = sand.u32 %s94, 1
          %s393 = scalar_lea.sflag [#allocation3], %s392
          %s394 = sand.u32 %s94, 1
          %s395 = smul.addr %s394, 128
          %s396 = scalar_lea.vmem [#allocation2], %s395
          %398 = dma.done %s393, 2048
        $region44: #{conv_block_forward.3} parent=39 // pred_fallthru
          _
      $region40: #{conv_block_forward.3} parent=5 // pred_fallthru
        _
    $region6: #{conv_block_forward.3} parent=1 // loop_footer
      %s16 = sadd.s32 1, %s12
    $region7: #{conv_block_forward.3} parent=1 // loop_footer_branch
      %11 = sbr.rel target = $region3
    $region8: #{conv_block_forward.3} parent=1 // loop_exit
      _
    %399 = vsyncpa [#allocation3], 1
    %s400 = scalar_lea.sflag [#allocation3], 1
    %401 = vsyncpa %s400, 1

// kernel: conv_block_forward.2
$region0: #{conv_block_forward.2}
  #allocation0 [shape = 'u32[]', space=smem, size = 0x4, offset = 0x4, fixed_abs, tag = 'smem constant byte address 0x4 - core index']
  #allocation1 [shape = 'u32[72,128]{1,0:T(1,128)}', space=vmem, size = 0x9000, scoped, tag = 'internal scratch']
  %s0 = inlined_call_operand.vmem [shape: f32[2,4,342], index: 0, kind: input, shape index: {}]
  %s1 = inlined_call_operand.vmem [shape: f32[9,8,4], index: 1, kind: input, shape index: {}]
  %s2 = inlined_call_operand.vmem [shape: f32[1,288], index: 2, kind: input, shape index: {}]
  %s3 = inlined_call_operand.vmem [shape: f32[2,8,288], index: 3, kind: output, shape index: {0}]
  %s4 = inlined_call_operand.vmem [shape: f32[2,8,1], index: 4, kind: output, shape index: {1}]
  %s5 = inlined_call_operand.vmem [shape: f32[2,8,1], index: 5, kind: output, shape index: {2}]
  %6 = xla_tuple %s3, %s4, %s5
  %s7 = sld [smem:[#allocation0]]
  $region61: #{conv_block_forward.2} parent=0
    _
  %s9 = ssub.s32 1, %s7
  %s10 = scalar_select 0, %s9, %s7
  loop: start=0, step=1, limit=4
  $region2: #{conv_block_forward.2} parent=0 // loop_pre_header
    _
  $region3: #{conv_block_forward.2} parent=0 // loop_header
    %s12 = sphi 0, %s16
    %p13 = scmp.ge.s32.totalorder %s12, 4
    %s22 = sphi 0, %s24
    %s25 = sphi 0, %s22
    %s26 = sphi 0, %s25
    %s42 = sphi 0, %s26
    %s46 = sphi 0, %s46
    %s48 = sphi 0, %s46
    %s49 = sphi 0, %s48
    %s63 = sphi 0, %s49
    %s67 = sphi 0, %s67
    %s69 = sphi 0, %s67
    %s70 = sphi 0, %s69
    %s84 = sphi 0, %s70
    %s90 = sphi 0, %s92
    %s93 = sphi 0, %s90
    %s94 = sphi 0, %s93
    %s110 = sphi 0, %s94
    %s116 = sphi 0, %s118
    %s119 = sphi 0, %s116
    %s120 = sphi 0, %s119
    %s136 = sphi 0, %s120
    %s142 = sphi 0, %s144
    %s145 = sphi 0, %s142
    %s146 = sphi 0, %s145
    %s162 = sphi 0, %s146
  $region4: #{conv_block_forward.2} parent=0 // loop_header_branch
    %15 = sbr.rel (%p13) target = $region8
  $region5: #{conv_block_forward.2} parent=0 // loop_body
    %s17 = ssub.s32 %s12, 1
    %s18 = ssub.s32 %s12, 2
    %s19 = sadd.s32 %s12, 1
    %s20 = ssub.s32 %s12, %s19
    %p21 = scmp.eq.s32.totalorder %s20, 0
    %s23 = sadd.s32 %s22, 1
    %s24 = scalar_select %p21, %s22, %s23
    %p27 = pneg %p21
    %p28 = scmp.eq.s32.totalorder %s12, 1
    %p29 = por %p27, %p28
    %p30 = scmp.ne.s32.totalorder %s22, %s25
    %p31 = scmp.eq.s32.totalorder %s12, 0
    %p32 = por %p30, %p31
    %p33 = scmp.ne.s32.totalorder %s22, %s25
    %p34 = scmp.eq.s32.totalorder %s17, 1
    %p35 = por %p33, %p34
    %p36 = scmp.ne.s32.totalorder %s25, %s26
    %p37 = scmp.eq.s32.totalorder %s17, 0
    %p38 = por %p36, %p37
    %p39 = scmp.ne.s32.totalorder %s25, %s26
    %p40 = scmp.eq.s32.totalorder %s18, 1
    %p41 = por %p39, %p40
    %p43 = scmp.ne.s32.totalorder %s26, %s42
    %p44 = scmp.eq.s32.totalorder %s18, 0
    %p45 = por %p43, %p44
    %s47 = sadd.s32 %s46, 1
    %p50 = scmp.eq.s32.totalorder %s12, 1
    %p51 = scmp.ne.s32.totalorder %s46, %s48
    %p52 = scmp.eq.s32.totalorder %s12, 0
    %p53 = por %p51, %p52
    %p54 = scmp.ne.s32.totalorder %s46, %s48
    %p55 = scmp.eq.s32.totalorder %s17, 1
    %p56 = por %p54, %p55
    %p57 = scmp.ne.s32.totalorder %s48, %s49
    %p58 = scmp.eq.s32.totalorder %s17, 0
    %p59 = por %p57, %p58
    %p60 = scmp.ne.s32.totalorder %s48, %s49
    %p61 = scmp.eq.s32.totalorder %s18, 1
    %p62 = por %p60, %p61
    %p64 = scmp.ne.s32.totalorder %s49, %s63
    %p65 = scmp.eq.s32.totalorder %s18, 0
    %p66 = por %p64, %p65
    %s68 = sadd.s32 %s67, 1
    %p71 = scmp.eq.s32.totalorder %s12, 1
    %p72 = scmp.ne.s32.totalorder %s67, %s69
    %p73 = scmp.eq.s32.totalorder %s12, 0
    %p74 = por %p72, %p73
    %p75 = scmp.ne.s32.totalorder %s67, %s69
    %p76 = scmp.eq.s32.totalorder %s17, 1
    %p77 = por %p75, %p76
    %p78 = scmp.ne.s32.totalorder %s69, %s70
    %p79 = scmp.eq.s32.totalorder %s17, 0
    %p80 = por %p78, %p79
    %p81 = scmp.ne.s32.totalorder %s69, %s70
    %p82 = scmp.eq.s32.totalorder %s18, 1
    %p83 = por %p81, %p82
    %p85 = scmp.ne.s32.totalorder %s70, %s84
    %p86 = scmp.eq.s32.totalorder %s18, 0
    %p87 = por %p85, %p86
    %s88 = ssub.s32 %s12, %s19
    %p89 = scmp.eq.s32.totalorder %s88, 0
    %s91 = sadd.s32 %s90, 1
    %s92 = scalar_select %p89, %s90, %s91
    %p95 = pneg %p89
    %p96 = scmp.eq.s32.totalorder %s12, 1
    %p97 = por %p95, %p96
    %p98 = scmp.ne.s32.totalorder %s90, %s93
    %p99 = scmp.eq.s32.totalorder %s12, 0
    %p100 = por %p98, %p99
    %p101 = scmp.ne.s32.totalorder %s90, %s93
    %p102 = scmp.eq.s32.totalorder %s17, 1
    %p103 = por %p101, %p102
    %p104 = scmp.ne.s32.totalorder %s93, %s94
    %p105 = scmp.eq.s32.totalorder %s17, 0
    %p106 = por %p104, %p105
    %p107 = scmp.ne.s32.totalorder %s93, %s94
    %p108 = scmp.eq.s32.totalorder %s18, 1
    %p109 = por %p107, %p108
    %p111 = scmp.ne.s32.totalorder %s94, %s110
    %p112 = scmp.eq.s32.totalorder %s18, 0
    %p113 = por %p111, %p112
    %s114 = ssub.s32 %s12, %s19
    %p115 = scmp.eq.s32.totalorder %s114, 0
    %s117 = sadd.s32 %s116, 1
    %s118 = scalar_select %p115, %s116, %s117
    %p121 = pneg %p115
    %p122 = scmp.eq.s32.totalorder %s12, 1
    %p123 = por %p121, %p122
    %p124 = scmp.ne.s32.totalorder %s116, %s119
    %p125 = scmp.eq.s32.totalorder %s12, 0
    %p126 = por %p124, %p125
    %p127 = scmp.ne.s32.totalorder %s116, %s119
    %p128 = scmp.eq.s32.totalorder %s17, 1
    %p129 = por %p127, %p128
    %p130 = scmp.ne.s32.totalorder %s119, %s120
    %p131 = scmp.eq.s32.totalorder %s17, 0
    %p132 = por %p130, %p131
    %p133 = scmp.ne.s32.totalorder %s119, %s120
    %p134 = scmp.eq.s32.totalorder %s18, 1
    %p135 = por %p133, %p134
    %p137 = scmp.ne.s32.totalorder %s120, %s136
    %p138 = scmp.eq.s32.totalorder %s18, 0
    %p139 = por %p137, %p138
    %s140 = ssub.s32 %s12, %s19
    %p141 = scmp.eq.s32.totalorder %s140, 0
    %s143 = sadd.s32 %s142, 1
    %s144 = scalar_select %p141, %s142, %s143
    %p147 = pneg %p141
    %p148 = scmp.eq.s32.totalorder %s12, 1
    %p149 = por %p147, %p148
    %p150 = scmp.ne.s32.totalorder %s142, %s145
    %p151 = scmp.eq.s32.totalorder %s12, 0
    %p152 = por %p150, %p151
    %p153 = scmp.ne.s32.totalorder %s142, %s145
    %p154 = scmp.eq.s32.totalorder %s17, 1
    %p155 = por %p153, %p154
    %p156 = scmp.ne.s32.totalorder %s145, %s146
    %p157 = scmp.eq.s32.totalorder %s17, 0
    %p158 = por %p156, %p157
    %p159 = scmp.ne.s32.totalorder %s145, %s146
    %p160 = scmp.eq.s32.totalorder %s18, 1
    %p161 = por %p159, %p160
    %p163 = scmp.ne.s32.totalorder %s146, %s162
    %p164 = scmp.eq.s32.totalorder %s18, 0
    %p165 = por %p163, %p164
    %p166 = scmp.le.s32.totalorder 1, %s12
    %p167 = scmp.lt.s32.totalorder %s12, 3
    %p168 = pnand %p166, %p167
    %p169 = pneg %p168
    // Predicated region
    $region9: #{conv_block_forward.2} parent=5 // pred_check
      _
    $region10: #{conv_block_forward.2} parent=5 // pred_check_branch
      %171 = sbr.rel (%p168) target = $region12
    $region11: #{conv_block_forward.2} parent=5 // pred_region
      %s172 = ssub.s32 %s12, 1
      // Predicated region
      $region13: #{conv_block_forward.2} parent=11 // pred_check
        %p173 = pneg %p59
      $region14: #{conv_block_forward.2} parent=11 // pred_check_branch
        %175 = sbr.rel (%p173) target = $region16
      $region15: #{conv_block_forward.2} parent=11 // pred_region
        _
      $region16: #{conv_block_forward.2} parent=11 // pred_fallthru
        _
      // Predicated region
      $region17: #{conv_block_forward.2} parent=11 // pred_check
        %p176 = pneg %p80
      $region18: #{conv_block_forward.2} parent=11 // pred_check_branch
        %178 = sbr.rel (%p176) target = $region20
      $region19: #{conv_block_forward.2} parent=11 // pred_region
        _
      $region20: #{conv_block_forward.2} parent=11 // pred_fallthru
        _
    $region12: #{conv_block_forward.2} parent=5 // pred_fallthru
      _
    %p179 = scmp.lt.s32.totalorder %s12, 2
    // Predicated region
    $region21: #{conv_block_forward.2} parent=5 // pred_check
      %p180 = pneg %p179
    $region22: #{conv_block_forward.2} parent=5 // pred_check_branch
      %182 = sbr.rel (%p180) target = $region24
    $region23: #{conv_block_forward.2} parent=5 // pred_region
      // Predicated region
      $region25: #{conv_block_forward.2} parent=23 // pred_check
        %p183 = pneg %p32
      $region26: #{conv_block_forward.2} parent=23 // pred_check_branch
        %185 = sbr.rel (%p183) target = $region28
      $region27: #{conv_block_forward.2} parent=23 // pred_region
        %p186 = scmp.lt.s32.totalorder %s12, 1
        %s187 = scalar_select %p186, %s12, 1
        %s188 = smul.addr %s187, 3
        %s189 = smul.addr %s188, 4
        %s190 = scalar_lea.vmem %s0, %s189
      $region28: #{conv_block_forward.2} parent=23 // pred_fallthru
        _
    $region24: #{conv_block_forward.2} parent=5 // pred_fallthru
      _
    %p191 = scmp.le.s32.totalorder 1, %s12
    %p192 = scmp.lt.s32.totalorder %s12, 3
    %p193 = pnand %p191, %p192
    %p194 = pneg %p193
    // Predicated region
    $region29: #{conv_block_forward.2} parent=5 // pred_check
      _
    $region30: #{conv_block_forward.2} parent=5 // pred_check_branch
      %196 = sbr.rel (%p193) target = $region32
    $region31: #{conv_block_forward.2} parent=5 // pred_region
      %s197 = ssub.s32 %s12, 1
      %p198 = scmp.lt.s32.totalorder %s17, 1
      %s199 = scalar_select %p198, %s17, 1
      %s200 = smul.addr %s199, 3
      %s201 = smul.addr %s200, 4
      %s202 = scalar_lea.vmem %s0, %s201
      %p203 = pneg %p38
      %p204 = pneg %p35
      %p205 = pneg %p59
      %p206 = pneg %p56
      %p207 = pneg %p80
      %p208 = pneg %p77
      %p209 = pneg %p106
      %p210 = pneg %p103
      %p211 = scmp.lt.s32.totalorder %s17, 1
      %s212 = scalar_select %p211, %s17, 1
      %s213 = smul.addr %s212, 3
      %s214 = smul.addr %s213, 8
      %s215 = scalar_lea.vmem %s3, %s214
      %p216 = pneg %p132
      %p217 = pneg %p129
      %p218 = scmp.lt.s32.totalorder %s17, 1
      %s219 = scalar_select %p218, %s17, 1
      %s220 = smul.addr %s219, 8
      %s221 = scalar_lea.vmem %s4, %s220
      %p222 = pneg %p158
      %p223 = pneg %p155
      %p224 = scmp.lt.s32.totalorder %s17, 1
      %s225 = scalar_select %p224, %s17, 1
      %s226 = smul.addr %s225, 8
      %s227 = scalar_lea.vmem %s5, %s226
      %p228 = scmp.lt.s32.totalorder %s17, 1
      %s229 = scalar_select %p228, %s17, 1
      %s230 = smul.addr %s229, 3
      %s231 = smul.addr %s230, 4
      %s232 = scalar_lea.vmem %s0, %s231
      %p233 = scmp.lt.s32.totalorder %s17, 1
      %s234 = scalar_select %p233, %s17, 1
      %s235 = smul.addr %s234, 3
      %s236 = smul.addr %s235, 8
      %s237 = scalar_lea.vmem %s3, %s236
      %p238 = scmp.lt.s32.totalorder %s17, 1
      %s239 = scalar_select %p238, %s17, 1
      %s240 = smul.addr %s239, 8
      %s241 = scalar_lea.vmem %s4, %s240
      %p242 = scmp.lt.s32.totalorder %s17, 1
      %s243 = scalar_select %p242, %s17, 1
      %s244 = smul.addr %s243, 8
      %s245 = scalar_lea.vmem %s5, %s244
      %v246 = vld [vmem:[%s232] sm:$0xff]
      %v247 = vld [vmem:[%s232 + $0x8] sm:$0xf]
      %v248 = vld [vmem:[%s1] sm:$0xff]
      %s249 = scalar_lea.vmem %s1, 8
      %v250 = vld [vmem:[%s249] sm:$0xff]
      %253 = vst [vmem:[#allocation1] ss:$2 sm:$0xff] %v246
      %s254 = scalar_lea.vmem [#allocation1], 16
      %255 = vst [vmem:[%s254] ss:$2 sm:$0xff] %v247
      %v256 = vld.sshfl [vmem:[#allocation1] sm:$0xff pattern:$0x75316420]
      %v257 = vld.sshfl [vmem:[#allocation1 + $0x8] sm:$0xff pattern:$0x75316420]
      %v258 = vld.sshfl [vmem:[#allocation1 + $0x10] sm:$0xff pattern:$0x75316420]
      %259 = vrot.lane.b32.xlu0 %v256, 127
      %v260 = vpop.permute.xlu0 %259
      %261 = vrot.lane.b32.xlu0 %v257, 127
      %v262 = vpop.permute.xlu0 %261
      %263 = vrot.lane.b32.xlu0 %v258, 127
      %v264 = vpop.permute.xlu0 %263
      %vm265 = vcmask 1039360
      %v266 = vsel %vm265, %v260, %v262
      %v267 = vsel %vm265, %v262, %v264
      %vm268 = vcmask 31744
      %v270 = vsel %vm268, %v250, 0
      %vm272 = vcmask 1043456
      %v273 = vsel %vm272, %v266, 0
      %v275 = vsel %vm272, %v267, 0
      %v277 = vsel %vm272, %v264, 0
      %279 = vmatpush.msra.mxu0 0.0
      %280 = vmatpush.msra.mxu0 0.0
      %281 = vmatpush.msra.mxu0 0.0
      %282 = vmatpush.msra.mxu0 0.0
      %283 = vmatpush.msra.mxu0 0.0
      %284 = vmatpush.msra.mxu0 0.0
      %285 = vmatpush.msra.mxu0 0.0
      %286 = vmatpush.msra.mxu0 0.0
      %287 = vmatpush.msra.mxu0 0.0
      %288 = vmatpush.msra.mxu0 0.0
      %289 = vmatpush.msra.mxu0 0.0
      %290 = vmatpush.msra.mxu0 0.0
      %291 = vmatpush.msra.mxu0 0.0
      %292 = vmatpush.msra.mxu0 0.0
      %293 = vmatpush.msra.mxu0 0.0
      %294 = vmatpush.msra.mxu0 %v273
      %295 = vmatmul.f32.gmra.mxu0 %v270
      %v296 = vpop.f32.mrf.mxu0
      %v297 = vadd.f32 0.0, %v296
      %298 = vdwg.mxu0
      %299 = vmatpush.msra.mxu0 0.0
      %300 = vmatpush.msra.mxu0 0.0
      %301 = vmatpush.msra.mxu0 0.0
      %302 = vmatpush.msra.mxu0 0.0
      %303 = vmatpush.msra.mxu0 0.0
      %304 = vmatpush.msra.mxu0 0.0
      %305 = vmatpush.msra.mxu0 0.0
      %306 = vmatpush.msra.mxu0 0.0
      %307 = vmatpush.msra.mxu0 0.0
      %308 = vmatpush.msra.mxu0 0.0
      %309 = vmatpush.msra.mxu0 0.0
      %310 = vmatpush.msra.mxu0 0.0
      %311 = vmatpush.msra.mxu0 0.0
      %312 = vmatpush.msra.mxu0 0.0
      %313 = vmatpush.msra.mxu0 0.0
      %314 = vmatpush.msra.mxu0 %v275
      %315 = vmatmul.f32.gmra.mxu0 %v270
      %v316 = vpop.f32.mrf.mxu0
      %v317 = vadd.f32 0.0, %v316
      %318 = vdwg.mxu0
      %319 = vmatpush.msra.mxu0 0.0
      %320 = vmatpush.msra.mxu0 0.0
      %321 = vmatpush.msra.mxu0 0.0
      %322 = vmatpush.msra.mxu0 0.0
      %323 = vmatpush.msra.mxu0 0.0
      %324 = vmatpush.msra.mxu0 0.0
      %325 = vmatpush.msra.mxu0 0.0
      %326 = vmatpush.msra.mxu0 0.0
      %327 = vmatpush.msra.mxu0 0.0
      %328 = vmatpush.msra.mxu0 0.0
      %329 = vmatpush.msra.mxu0 0.0
      %330 = vmatpush.msra.mxu0 0.0
      %331 = vmatpush.msra.mxu0 0.0
      %332 = vmatpush.msra.mxu0 0.0
      %333 = vmatpush.msra.mxu0 0.0
      %334 = vmatpush.msra.mxu0 %v277
      %335 = vmatmul.f32.gmra.mxu0 %v270
      %v336 = vpop.f32.mrf.mxu0
      %v337 = vadd.f32 0.0, %v336
      %338 = vdwg.mxu0
      %339 = vst [vmem:[#allocation1] ss:$2 sm:$0xff] %v246
      %s340 = scalar_lea.vmem [#allocation1], 16
      %341 = vst [vmem:[%s340] ss:$2 sm:$0xff] %v247
      %v342 = vld.sshfl [vmem:[#allocation1] sm:$0xff pattern:$0x75316420]
      %v343 = vld.sshfl [vmem:[#allocation1 + $0x8] sm:$0xff pattern:$0x75316420]
      %v344 = vld.sshfl [vmem:[#allocation1 + $0x10] sm:$0xff pattern:$0x75316420]
      %v346 = vsel %vm268, %v248, 0
      %v348 = vsel %vm272, %v342, 0
      %v350 = vsel %vm272, %v343, 0
      %v352 = vsel %vm272, %v344, 0
      %354 = vmatpush.msra.mxu0 0.0
      %355 = vmatpush.msra.mxu0 0.0
      %356 = vmatpush.msra.mxu0 0.0
      %357 = vmatpush.msra.mxu0 0.0
      %358 = vmatpush.msra.mxu0 0.0
      %359 = vmatpush.msra.mxu0 0.0
      %360 = vmatpush.msra.mxu0 0.0
      %361 = vmatpush.msra.mxu0 0.0
      %362 = vmatpush.msra.mxu0 0.0
      %363 = vmatpush.msra.mxu0 0.0
      %364 = vmatpush.msra.mxu0 0.0
      %365 = vmatpush.msra.mxu0 0.0
      %366 = vmatpush.msra.mxu0 0.0
      %367 = vmatpush.msra.mxu0 0.0
      %368 = vmatpush.msra.mxu0 0.0
      %369 = vmatpush.msra.mxu0 %v348
      %370 = vmatmul.f32.gmra.mxu0 %v346
      %v371 = vpop.f32.mrf.mxu0
      %v372 = vadd.f32 %v297, %v371
      %373 = vdwg.mxu0
      %374 = vmatpush.msra.mxu0 0.0
      %375 = vmatpush.msra.mxu0 0.0
      %376 = vmatpush.msra.mxu0 0.0
      %377 = vmatpush.msra.mxu0 0.0
      %378 = vmatpush.msra.mxu0 0.0
      %379 = vmatpush.msra.mxu0 0.0
      %380 = vmatpush.msra.mxu0 0.0
      %381 = vmatpush.msra.mxu0 0.0
      %382 = vmatpush.msra.mxu0 0.0
      %383 = vmatpush.msra.mxu0 0.0
      %384 = vmatpush.msra.mxu0 0.0
      %385 = vmatpush.msra.mxu0 0.0
      %386 = vmatpush.msra.mxu0 0.0
      %387 = vmatpush.msra.mxu0 0.0
      %388 = vmatpush.msra.mxu0 0.0
      %389 = vmatpush.msra.mxu0 %v350
      %390 = vmatmul.f32.gmra.mxu0 %v346
      %v391 = vpop.f32.mrf.mxu0
      %v392 = vadd.f32 %v317, %v391
      %393 = vdwg.mxu0
      %394 = vmatpush.msra.mxu0 0.0
      %395 = vmatpush.msra.mxu0 0.0
      %396 = vmatpush.msra.mxu0 0.0
      %397 = vmatpush.msra.mxu0 0.0
      %398 = vmatpush.msra.mxu0 0.0
      %399 = vmatpush.msra.mxu0 0.0
      %400 = vmatpush.msra.mxu0 0.0
      %401 = vmatpush.msra.mxu0 0.0
      %402 = vmatpush.msra.mxu0 0.0
      %403 = vmatpush.msra.mxu0 0.0
      %404 = vmatpush.msra.mxu0 0.0
      %405 = vmatpush.msra.mxu0 0.0
      %406 = vmatpush.msra.mxu0 0.0
      %407 = vmatpush.msra.mxu0 0.0
      %408 = vmatpush.msra.mxu0 0.0
      %409 = vmatpush.msra.mxu0 %v352
      %410 = vmatmul.f32.gmra.mxu0 %v346
      %v411 = vpop.f32.mrf.mxu0
      %v412 = vadd.f32 %v337, %v411
      %413 = vdwg.mxu0
      %s414 = scalar_lea.vmem %s1, 16
      %v415 = vld [vmem:[%s414] sm:$0xff]
      %416 = vst [vmem:[#allocation1] ss:$2 sm:$0xff] %v246
      %s417 = scalar_lea.vmem [#allocation1], 16
      %418 = vst [vmem:[%s417] ss:$2 sm:$0xff] %v247
      %v419 = vld.sshfl [vmem:[#allocation1] sm:$0xff pattern:$0x75316420]
      %v420 = vld.sshfl [vmem:[#allocation1 + $0x8] sm:$0xff pattern:$0x75316420]
      %v421 = vld.sshfl [vmem:[#allocation1 + $0x10] sm:$0xff pattern:$0x75316420]
      %422 = vrot.lane.b32.xlu0 %v419, 126
      %v423 = vpop.permute.xlu0 %422
      %424 = vrot.lane.b32.xlu0 %v420, 126
      %v425 = vpop.permute.xlu0 %424
      %426 = vrot.lane.b32.xlu0 %v421, 126
      %v427 = vpop.permute.xlu0 %426
      %vm428 = vcmask 1031168
      %v429 = vsel %vm428, %v423, %v425
      %v430 = vsel %vm428, %v425, %v427
      %v432 = vsel %vm268, %v415, 0
      %v434 = vsel %vm272, %v429, 0
      %v436 = vsel %vm272, %v430, 0
      %v438 = vsel %vm272, %v427, 0
      %440 = vmatpush.msra.mxu0 0.0
      %441 = vmatpush.msra.mxu0 0.0
      %442 = vmatpush.msra.mxu0 0.0
      %443 = vmatpush.msra.mxu0 0.0
      %444 = vmatpush.msra.mxu0 0.0
      %445 = vmatpush.msra.mxu0 0.0
      %446 = vmatpush.msra.mxu0 0.0
      %447 = vmatpush.msra.mxu0 0.0
      %448 = vmatpush.msra.mxu0 0.0
      %449 = vmatpush.msra.mxu0 0.0
      %450 = vmatpush.msra.mxu0 0.0
      %451 = vmatpush.msra.mxu0 0.0
      %452 = vmatpush.msra.mxu0 0.0
      %453 = vmatpush.msra.mxu0 0.0
      %454 = vmatpush.msra.mxu0 0.0
      %455 = vmatpush.msra.mxu0 %v434
      %456 = vmatmul.f32.gmra.mxu0 %v432
      %v457 = vpop.f32.mrf.mxu0
      %v458 = vadd.f32 0.0, %v457
      %459 = vdwg.mxu0
      %460 = vmatpush.msra.mxu0 0.0
      %461 = vmatpush.msra.mxu0 0.0
      %462 = vmatpush.msra.mxu0 0.0
      %463 = vmatpush.msra.mxu0 0.0
      %464 = vmatpush.msra.mxu0 0.0
      %465 = vmatpush.msra.mxu0 0.0
      %466 = vmatpush.msra.mxu0 0.0
      %467 = vmatpush.msra.mxu0 0.0
      %468 = vmatpush.msra.mxu0 0.0
      %469 = vmatpush.msra.mxu0 0.0
      %470 = vmatpush.msra.mxu0 0.0
      %471 = vmatpush.msra.mxu0 0.0
      %472 = vmatpush.msra.mxu0 0.0
      %473 = vmatpush.msra.mxu0 0.0
      %474 = vmatpush.msra.mxu0 0.0
      %475 = vmatpush.msra.mxu0 %v436
      %476 = vmatmul.f32.gmra.mxu0 %v432
      %v477 = vpop.f32.mrf.mxu0
      %v478 = vadd.f32 0.0, %v477
      %479 = vdwg.mxu0
      %480 = vmatpush.msra.mxu0 0.0
      %481 = vmatpush.msra.mxu0 0.0
      %482 = vmatpush.msra.mxu0 0.0
      %483 = vmatpush.msra.mxu0 0.0
      %484 = vmatpush.msra.mxu0 0.0
      %485 = vmatpush.msra.mxu0 0.0
      %486 = vmatpush.msra.mxu0 0.0
      %487 = vmatpush.msra.mxu0 0.0
      %488 = vmatpush.msra.mxu0 0.0
      %489 = vmatpush.msra.mxu0 0.0
      %490 = vmatpush.msra.mxu0 0.0
      %491 = vmatpush.msra.mxu0 0.0
      %492 = vmatpush.msra.mxu0 0.0
      %493 = vmatpush.msra.mxu0 0.0
      %494 = vmatpush.msra.mxu0 0.0
      %495 = vmatpush.msra.mxu0 %v438
      %496 = vmatmul.f32.gmra.mxu0 %v432
      %v497 = vpop.f32.mrf.mxu0
      %v498 = vadd.f32 0.0, %v497
      %499 = vdwg.mxu0
      %v500 = vadd.f32 %v372, %v458
      %v501 = vadd.f32 %v392, %v478
      %v502 = vadd.f32 %v412, %v498
      %s503 = scalar_lea.vmem %s1, 24
      %v504 = vld [vmem:[%s503] sm:$0xff]
      %505 = vst [vmem:[#allocation1] ss:$2 sm:$0xff] %v246
      %s506 = scalar_lea.vmem [#allocation1], 16
      %507 = vst [vmem:[%s506] ss:$2 sm:$0xff] %v247
      %v508 = vld.sshfl [vmem:[#allocation1] sm:$0xff pattern:$0x75316420]
      %v509 = vld.sshfl [vmem:[#allocation1 + $0x8] sm:$0xff pattern:$0x75316420]
      %v510 = vld.sshfl [vmem:[#allocation1 + $0x10] sm:$0xff pattern:$0x75316420]
      %511 = vrot.lane.b32.xlu0 %v508, 110
      %v512 = vpop.permute.xlu0 %511
      %513 = vrot.lane.b32.xlu0 %v509, 110
      %v514 = vpop.permute.xlu0 %513
      %515 = vrot.lane.b32.xlu0 %v510, 110
      %v516 = vpop.permute.xlu0 %515
      %vm517 = vcmask 900096
      %v518 = vsel %vm517, %v512, %v514
      %v519 = vsel %vm517, %v514, %v516
      %v521 = vsel %vm268, %v504, 0
      %v523 = vsel %vm272, %v518, 0
      %v525 = vsel %vm272, %v519, 0
      %v527 = vsel %vm272, %v516, 0
      %529 = vmatpush.msra.mxu0 0.0
      %530 = vmatpush.msra.mxu0 0.0
      %531 = vmatpush.msra.mxu0 0.0
      %532 = vmatpush.msra.mxu0 0.0
      %533 = vmatpush.msra.mxu0 0.0
      %534 = vmatpush.msra.mxu0 0.0
      %535 = vmatpush.msra.mxu0 0.0
      %536 = vmatpush.msra.mxu0 0.0
      %537 = vmatpush.msra.mxu0 0.0
      %538 = vmatpush.msra.mxu0 0.0
      %539 = vmatpush.msra.mxu0 0.0
      %540 = vmatpush.msra.mxu0 0.0
      %541 = vmatpush.msra.mxu0 0.0
      %542 = vmatpush.msra.mxu0 0.0
      %543 = vmatpush.msra.mxu0 0.0
      %544 = vmatpush.msra.mxu0 %v523
      %545 = vmatmul.f32.gmra.mxu0 %v521
      %v546 = vpop.f32.mrf.mxu0
      %v547 = vadd.f32 0.0, %v546
      %548 = vdwg.mxu0
      %549 = vmatpush.msra.mxu0 0.0
      %550 = vmatpush.msra.mxu0 0.0
      %551 = vmatpush.msra.mxu0 0.0
      %552 = vmatpush.msra.mxu0 0.0
      %553 = vmatpush.msra.mxu0 0.0
      %554 = vmatpush.msra.mxu0 0.0
      %555 = vmatpush.msra.mxu0 0.0
      %556 = vmatpush.msra.mxu0 0.0
      %557 = vmatpush.msra.mxu0 0.0
      %558 = vmatpush.msra.mxu0 0.0
      %559 = vmatpush.msra.mxu0 0.0
      %560 = vmatpush.msra.mxu0 0.0
      %561 = vmatpush.msra.mxu0 0.0
      %562 = vmatpush.msra.mxu0 0.0
      %563 = vmatpush.msra.mxu0 0.0
      %564 = vmatpush.msra.mxu0 %v525
      %565 = vmatmul.f32.gmra.mxu0 %v521
      %v566 = vpop.f32.mrf.mxu0
      %v567 = vadd.f32 0.0, %v566
      %568 = vdwg.mxu0
      %569 = vmatpush.msra.mxu0 0.0
      %570 = vmatpush.msra.mxu0 0.0
      %571 = vmatpush.msra.mxu0 0.0
      %572 = vmatpush.msra.mxu0 0.0
      %573 = vmatpush.msra.mxu0 0.0
      %574 = vmatpush.msra.mxu0 0.0
      %575 = vmatpush.msra.mxu0 0.0
      %576 = vmatpush.msra.mxu0 0.0
      %577 = vmatpush.msra.mxu0 0.0
      %578 = vmatpush.msra.mxu0 0.0
      %579 = vmatpush.msra.mxu0 0.0
      %580 = vmatpush.msra.mxu0 0.0
      %581 = vmatpush.msra.mxu0 0.0
      %582 = vmatpush.msra.mxu0 0.0
      %583 = vmatpush.msra.mxu0 0.0
      %584 = vmatpush.msra.mxu0 %v527
      %585 = vmatmul.f32.gmra.mxu0 %v521
      %v586 = vpop.f32.mrf.mxu0
      %v587 = vadd.f32 0.0, %v586
      %588 = vdwg.mxu0
      %v589 = vadd.f32 %v500, %v547
      %v590 = vadd.f32 %v501, %v567
      %v591 = vadd.f32 %v502, %v587
      %s592 = scalar_lea.vmem %s1, 32
      %v593 = vld [vmem:[%s592] sm:$0xff]
      %594 = vst [vmem:[#allocation1] ss:$2 sm:$0xff] %v246
      %s595 = scalar_lea.vmem [#allocation1], 16
      %596 = vst [vmem:[%s595] ss:$2 sm:$0xff] %v247
      %v597 = vld.sshfl [vmem:[#allocation1] sm:$0xff pattern:$0x75316420]
      %v598 = vld.sshfl [vmem:[#allocation1 + $0x8] sm:$0xff pattern:$0x75316420]
      %v599 = vld.sshfl [vmem:[#allocation1 + $0x10] sm:$0xff pattern:$0x75316420]
      %600 = vrot.lane.b32.xlu0 %v597, 109
      %v601 = vpop.permute.xlu0 %600
      %602 = vrot.lane.b32.xlu0 %v598, 109
      %v603 = vpop.permute.xlu0 %602
      %604 = vrot.lane.b32.xlu0 %v599, 109
      %v605 = vpop.permute.xlu0 %604
      %vm606 = vcmask 891904
      %v607 = vsel %vm606, %v601, %v603
      %v608 = vsel %vm606, %v603, %v605
      %v610 = vsel %vm268, %v593, 0
      %v612 = vsel %vm272, %v607, 0
      %v614 = vsel %vm272, %v608, 0
      %v616 = vsel %vm272, %v605, 0
      %618 = vmatpush.msra.mxu0 0.0
      %619 = vmatpush.msra.mxu0 0.0
      %620 = vmatpush.msra.mxu0 0.0
      %621 = vmatpush.msra.mxu0 0.0
      %622 = vmatpush.msra.mxu0 0.0
      %623 = vmatpush.msra.mxu0 0.0
      %624 = vmatpush.msra.mxu0 0.0
      %625 = vmatpush.msra.mxu0 0.0
      %626 = vmatpush.msra.mxu0 0.0
      %627 = vmatpush.msra.mxu0 0.0
      %628 = vmatpush.msra.mxu0 0.0
      %629 = vmatpush.msra.mxu0 0.0
      %630 = vmatpush.msra.mxu0 0.0
      %631 = vmatpush.msra.mxu0 0.0
      %632 = vmatpush.msra.mxu0 0.0
      %633 = vmatpush.msra.mxu0 %v612
      %634 = vmatmul.f32.gmra.mxu0 %v610
      %v635 = vpop.f32.mrf.mxu0
      %v636 = vadd.f32 0.0, %v635
      %637 = vdwg.mxu0
      %638 = vmatpush.msra.mxu0 0.0
      %639 = vmatpush.msra.mxu0 0.0
      %640 = vmatpush.msra.mxu0 0.0
      %641 = vmatpush.msra.mxu0 0.0
      %642 = vmatpush.msra.mxu0 0.0
      %643 = vmatpush.msra.mxu0 0.0
      %644 = vmatpush.msra.mxu0 0.0
      %645 = vmatpush.msra.mxu0 0.0
      %646 = vmatpush.msra.mxu0 0.0
      %647 = vmatpush.msra.mxu0 0.0
      %648 = vmatpush.msra.mxu0 0.0
      %649 = vmatpush.msra.mxu0 0.0
      %650 = vmatpush.msra.mxu0 0.0
      %651 = vmatpush.msra.mxu0 0.0
      %652 = vmatpush.msra.mxu0 0.0
      %653 = vmatpush.msra.mxu0 %v614
      %654 = vmatmul.f32.gmra.mxu0 %v610
      %v655 = vpop.f32.mrf.mxu0
      %v656 = vadd.f32 0.0, %v655
      %657 = vdwg.mxu0
      %658 = vmatpush.msra.mxu0 0.0
      %659 = vmatpush.msra.mxu0 0.0
      %660 = vmatpush.msra.mxu0 0.0
      %661 = vmatpush.msra.mxu0 0.0
      %662 = vmatpush.msra.mxu0 0.0
      %663 = vmatpush.msra.mxu0 0.0
      %664 = vmatpush.msra.mxu0 0.0
      %665 = vmatpush.msra.mxu0 0.0
      %666 = vmatpush.msra.mxu0 0.0
      %667 = vmatpush.msra.mxu0 0.0
      %668 = vmatpush.msra.mxu0 0.0
      %669 = vmatpush.msra.mxu0 0.0
      %670 = vmatpush.msra.mxu0 0.0
      %671 = vmatpush.msra.mxu0 0.0
      %672 = vmatpush.msra.mxu0 0.0
      %673 = vmatpush.msra.mxu0 %v616
      %674 = vmatmul.f32.gmra.mxu0 %v610
      %v675 = vpop.f32.mrf.mxu0
      %v676 = vadd.f32 0.0, %v675
      %677 = vdwg.mxu0
      %v678 = vadd.f32 %v589, %v636
      %v679 = vadd.f32 %v590, %v656
      %v680 = vadd.f32 %v591, %v676
      %s681 = scalar_lea.vmem %s1, 40
      %v682 = vld [vmem:[%s681] sm:$0xff]
      %683 = vst [vmem:[#allocation1] ss:$2 sm:$0xff] %v246
      %s684 = scalar_lea.vmem [#allocation1], 16
      %685 = vst [vmem:[%s684] ss:$2 sm:$0xff] %v247
      %v686 = vld.sshfl [vmem:[#allocation1] sm:$0xff pattern:$0x75316420]
      %v687 = vld.sshfl [vmem:[#allocation1 + $0x8] sm:$0xff pattern:$0x75316420]
      %v688 = vld.sshfl [vmem:[#allocation1 + $0x10] sm:$0xff pattern:$0x75316420]
      %689 = vrot.lane.b32.xlu0 %v686, 108
      %v690 = vpop.permute.xlu0 %689
      %691 = vrot.lane.b32.xlu0 %v687, 108
      %v692 = vpop.permute.xlu0 %691
      %693 = vrot.lane.b32.xlu0 %v688, 108
      %v694 = vpop.permute.xlu0 %693
      %vm695 = vcmask 883712
      %v696 = vsel %vm695, %v690, %v692
      %v697 = vsel %vm695, %v692, %v694
      %v699 = vsel %vm268, %v682, 0
      %v701 = vsel %vm272, %v696, 0
      %v703 = vsel %vm272, %v697, 0
      %v705 = vsel %vm272, %v694, 0
      %707 = vmatpush.msra.mxu0 0.0
      %708 = vmatpush.msra.mxu0 0.0
      %709 = vmatpush.msra.mxu0 0.0
      %710 = vmatpush.msra.mxu0 0.0
      %711 = vmatpush.msra.mxu0 0.0
      %712 = vmatpush.msra.mxu0 0.0
      %713 = vmatpush.msra.mxu0 0.0
      %714 = vmatpush.msra.mxu0 0.0
      %715 = vmatpush.msra.mxu0 0.0
      %716 = vmatpush.msra.mxu0 0.0
      %717 = vmatpush.msra.mxu0 0.0
      %718 = vmatpush.msra.mxu0 0.0
      %719 = vmatpush.msra.mxu0 0.0
      %720 = vmatpush.msra.mxu0 0.0
      %721 = vmatpush.msra.mxu0 0.0
      %722 = vmatpush.msra.mxu0 %v701
      %723 = vmatmul.f32.gmra.mxu0 %v699
      %v724 = vpop.f32.mrf.mxu0
      %v725 = vadd.f32 0.0, %v724
      %726 = vdwg.mxu0
      %727 = vmatpush.msra.mxu0 0.0
      %728 = vmatpush.msra.mxu0 0.0
      %729 = vmatpush.msra.mxu0 0.0
      %730 = vmatpush.msra.mxu0 0.0
      %731 = vmatpush.msra.mxu0 0.0
      %732 = vmatpush.msra.mxu0 0.0
      %733 = vmatpush.msra.mxu0 0.0
      %734 = vmatpush.msra.mxu0 0.0
      %735 = vmatpush.msra.mxu0 0.0
      %736 = vmatpush.msra.mxu0 0.0
      %737 = vmatpush.msra.mxu0 0.0
      %738 = vmatpush.msra.mxu0 0.0
      %739 = vmatpush.msra.mxu0 0.0
      %740 = vmatpush.msra.mxu0 0.0
      %741 = vmatpush.msra.mxu0 0.0
      %742 = vmatpush.msra.mxu0 %v703
      %743 = vmatmul.f32.gmra.mxu0 %v699
      %v744 = vpop.f32.mrf.mxu0
      %v745 = vadd.f32 0.0, %v744
      %746 = vdwg.mxu0
      %747 = vmatpush.msra.mxu0 0.0
      %748 = vmatpush.msra.mxu0 0.0
      %749 = vmatpush.msra.mxu0 0.0
      %750 = vmatpush.msra.mxu0 0.0
      %751 = vmatpush.msra.mxu0 0.0
      %752 = vmatpush.msra.mxu0 0.0
      %753 = vmatpush.msra.mxu0 0.0
      %754 = vmatpush.msra.mxu0 0.0
      %755 = vmatpush.msra.mxu0 0.0
      %756 = vmatpush.msra.mxu0 0.0
      %757 = vmatpush.msra.mxu0 0.0
      %758 = vmatpush.msra.mxu0 0.0
      %759 = vmatpush.msra.mxu0 0.0
      %760 = vmatpush.msra.mxu0 0.0
      %761 = vmatpush.msra.mxu0 0.0
      %762 = vmatpush.msra.mxu0 %v705
      %763 = vmatmul.f32.gmra.mxu0 %v699
      %v764 = vpop.f32.mrf.mxu0
      %v765 = vadd.f32 0.0, %v764
      %766 = vdwg.mxu0
      %v767 = vadd.f32 %v678, %v725
      %v768 = vadd.f32 %v679, %v745
      %v769 = vadd.f32 %v680, %v765
      %s770 = scalar_lea.vmem %s1, 48
      %v771 = vld [vmem:[%s770] sm:$0xff]
      %772 = vst [vmem:[#allocation1] ss:$2 sm:$0xff] %v246
      %s773 = scalar_lea.vmem [#allocation1], 16
      %774 = vst [vmem:[%s773] ss:$2 sm:$0xff] %v247
      %v775 = vld.sshfl [vmem:[#allocation1] sm:$0xff pattern:$0x75316420]
      %v776 = vld.sshfl [vmem:[#allocation1 + $0x8] sm:$0xff pattern:$0x75316420]
      %v777 = vld.sshfl [vmem:[#allocation1 + $0x10] sm:$0xff pattern:$0x75316420]
      %778 = vrot.lane.b32.xlu0 %v775, 92
      %v779 = vpop.permute.xlu0 %778
      %780 = vrot.lane.b32.xlu0 %v776, 92
      %v781 = vpop.permute.xlu0 %780
      %782 = vrot.lane.b32.xlu0 %v777, 92
      %v783 = vpop.permute.xlu0 %782
      %vm784 = vcmask 752640
      %v785 = vsel %vm784, %v779, %v781
      %v786 = vsel %vm784, %v781, %v783
      %v788 = vsel %vm268, %v771, 0
      %v790 = vsel %vm272, %v785, 0
      %v792 = vsel %vm272, %v786, 0
      %v794 = vsel %vm272, %v783, 0
      %796 = vmatpush.msra.mxu0 0.0
      %797 = vmatpush.msra.mxu0 0.0
      %798 = vmatpush.msra.mxu0 0.0
      %799 = vmatpush.msra.mxu0 0.0
      %800 = vmatpush.msra.mxu0 0.0
      %801 = vmatpush.msra.mxu0 0.0
      %802 = vmatpush.msra.mxu0 0.0
      %803 = vmatpush.msra.mxu0 0.0
      %804 = vmatpush.msra.mxu0 0.0
      %805 = vmatpush.msra.mxu0 0.0
      %806 = vmatpush.msra.mxu0 0.0
      %807 = vmatpush.msra.mxu0 0.0
      %808 = vmatpush.msra.mxu0 0.0
      %809 = vmatpush.msra.mxu0 0.0
      %810 = vmatpush.msra.mxu0 0.0
      %811 = vmatpush.msra.mxu0 %v790
      %812 = vmatmul.f32.gmra.mxu0 %v788
      %v813 = vpop.f32.mrf.mxu0
      %v814 = vadd.f32 0.0, %v813
      %815 = vdwg.mxu0
      %816 = vmatpush.msra.mxu0 0.0
      %817 = vmatpush.msra.mxu0 0.0
      %818 = vmatpush.msra.mxu0 0.0
      %819 = vmatpush.msra.mxu0 0.0
      %820 = vmatpush.msra.mxu0 0.0
      %821 = vmatpush.msra.mxu0 0.0
      %822 = vmatpush.msra.mxu0 0.0
      %823 = vmatpush.msra.mxu0 0.0
      %824 = vmatpush.msra.mxu0 0.0
      %825 = vmatpush.msra.mxu0 0.0
      %826 = vmatpush.msra.mxu0 0.0
      %827 = vmatpush.msra.mxu0 0.0
      %828 = vmatpush.msra.mxu0 0.0
      %829 = vmatpush.msra.mxu0 0.0
      %830 = vmatpush.msra.mxu0 0.0
      %831 = vmatpush.msra.mxu0 %v792
      %832 = vmatmul.f32.gmra.mxu0 %v788
      %v833 = vpop.f32.mrf.mxu0
      %v834 = vadd.f32 0.0, %v833
      %835 = vdwg.mxu0
      %836 = vmatpush.msra.mxu0 0.0
      %837 = vmatpush.msra.mxu0 0.0
      %838 = vmatpush.msra.mxu0 0.0
      %839 = vmatpush.msra.mxu0 0.0
      %840 = vmatpush.msra.mxu0 0.0
      %841 = vmatpush.msra.mxu0 0.0
      %842 = vmatpush.msra.mxu0 0.0
      %843 = vmatpush.msra.mxu0 0.0
      %844 = vmatpush.msra.mxu0 0.0
      %845 = vmatpush.msra.mxu0 0.0
      %846 = vmatpush.msra.mxu0 0.0
      %847 = vmatpush.msra.mxu0 0.0
      %848 = vmatpush.msra.mxu0 0.0
      %849 = vmatpush.msra.mxu0 0.0
      %850 = vmatpush.msra.mxu0 0.0
      %851 = vmatpush.msra.mxu0 %v794
      %852 = vmatmul.f32.gmra.mxu0 %v788
      %v853 = vpop.f32.mrf.mxu0
      %v854 = vadd.f32 0.0, %v853
      %855 = vdwg.mxu0
      %v856 = vadd.f32 %v767, %v814
      %v857 = vadd.f32 %v768, %v834
      %v858 = vadd.f32 %v769, %v854
      %s859 = scalar_lea.vmem %s1, 56
      %v860 = vld [vmem:[%s859] sm:$0xff]
      %861 = vst [vmem:[#allocation1] ss:$2 sm:$0xff] %v246
      %s862 = scalar_lea.vmem [#allocation1], 16
      %863 = vst [vmem:[%s862] ss:$2 sm:$0xff] %v247
      %v864 = vld.sshfl [vmem:[#allocation1] sm:$0xff pattern:$0x75316420]
      %v865 = vld.sshfl [vmem:[#allocation1 + $0x8] sm:$0xff pattern:$0x75316420]
      %v866 = vld.sshfl [vmem:[#allocation1 + $0x10] sm:$0xff pattern:$0x75316420]
      %867 = vrot.lane.b32.xlu0 %v864, 91
      %v868 = vpop.permute.xlu0 %867
      %869 = vrot.lane.b32.xlu0 %v865, 91
      %v870 = vpop.permute.xlu0 %869
      %871 = vrot.lane.b32.xlu0 %v866, 91
      %v872 = vpop.permute.xlu0 %871
      %vm873 = vcmask 744448
      %v874 = vsel %vm873, %v868, %v870
      %v875 = vsel %vm873, %v870, %v872
      %v877 = vsel %vm268, %v860, 0
      %v879 = vsel %vm272, %v874, 0
      %v881 = vsel %vm272, %v875, 0
      %v883 = vsel %vm272, %v872, 0
      %885 = vmatpush.msra.mxu0 0.0
      %886 = vmatpush.msra.mxu0 0.0
      %887 = vmatpush.msra.mxu0 0.0
      %888 = vmatpush.msra.mxu0 0.0
      %889 = vmatpush.msra.mxu0 0.0
      %890 = vmatpush.msra.mxu0 0.0
      %891 = vmatpush.msra.mxu0 0.0
      %892 = vmatpush.msra.mxu0 0.0
      %893 = vmatpush.msra.mxu0 0.0
      %894 = vmatpush.msra.mxu0 0.0
      %895 = vmatpush.msra.mxu0 0.0
      %896 = vmatpush.msra.mxu0 0.0
      %897 = vmatpush.msra.mxu0 0.0
      %898 = vmatpush.msra.mxu0 0.0
      %899 = vmatpush.msra.mxu0 0.0
      %900 = vmatpush.msra.mxu0 %v879
      %901 = vmatmul.f32.gmra.mxu0 %v877
      %v902 = vpop.f32.mrf.mxu0
      %v903 = vadd.f32 0.0, %v902
      %904 = vdwg.mxu0
      %905 = vmatpush.msra.mxu0 0.0
      %906 = vmatpush.msra.mxu0 0.0
      %907 = vmatpush.msra.mxu0 0.0
      %908 = vmatpush.msra.mxu0 0.0
      %909 = vmatpush.msra.mxu0 0.0
      %910 = vmatpush.msra.mxu0 0.0
      %911 = vmatpush.msra.mxu0 0.0
      %912 = vmatpush.msra.mxu0 0.0
      %913 = vmatpush.msra.mxu0 0.0
      %914 = vmatpush.msra.mxu0 0.0
      %915 = vmatpush.msra.mxu0 0.0
      %916 = vmatpush.msra.mxu0 0.0
      %917 = vmatpush.msra.mxu0 0.0
      %918 = vmatpush.msra.mxu0 0.0
      %919 = vmatpush.msra.mxu0 0.0
      %920 = vmatpush.msra.mxu0 %v881
      %921 = vmatmul.f32.gmra.mxu0 %v877
      %v922 = vpop.f32.mrf.mxu0
      %v923 = vadd.f32 0.0, %v922
      %924 = vdwg.mxu0
      %925 = vmatpush.msra.mxu0 0.0
      %926 = vmatpush.msra.mxu0 0.0
      %927 = vmatpush.msra.mxu0 0.0
      %928 = vmatpush.msra.mxu0 0.0
      %929 = vmatpush.msra.mxu0 0.0
      %930 = vmatpush.msra.mxu0 0.0
      %931 = vmatpush.msra.mxu0 0.0
      %932 = vmatpush.msra.mxu0 0.0
      %933 = vmatpush.msra.mxu0 0.0
      %934 = vmatpush.msra.mxu0 0.0
      %935 = vmatpush.msra.mxu0 0.0
      %936 = vmatpush.msra.mxu0 0.0
      %937 = vmatpush.msra.mxu0 0.0
      %938 = vmatpush.msra.mxu0 0.0
      %939 = vmatpush.msra.mxu0 0.0
      %940 = vmatpush.msra.mxu0 %v883
      %941 = vmatmul.f32.gmra.mxu0 %v877
      %v942 = vpop.f32.mrf.mxu0
      %v943 = vadd.f32 0.0, %v942
      %944 = vdwg.mxu0
      %v945 = vadd.f32 %v856, %v903
      %v946 = vadd.f32 %v857, %v923
      %v947 = vadd.f32 %v858, %v943
      %s948 = scalar_lea.vmem %s1, 64
      %v949 = vld [vmem:[%s948] sm:$0xff]
      %950 = vst [vmem:[#allocation1] ss:$2 sm:$0xff] %v246
      %s951 = scalar_lea.vmem [#allocation1], 16
      %952 = vst [vmem:[%s951] ss:$2 sm:$0xff] %v247
      %v953 = vld.sshfl [vmem:[#allocation1] sm:$0xff pattern:$0x75316420]
      %v954 = vld.sshfl [vmem:[#allocation1 + $0x8] sm:$0xff pattern:$0x75316420]
      %v955 = vld.sshfl [vmem:[#allocation1 + $0x10] sm:$0xff pattern:$0x75316420]
      %956 = vrot.lane.b32.xlu0 %v953, 90
      %v957 = vpop.permute.xlu0 %956
      %958 = vrot.lane.b32.xlu0 %v954, 90
      %v959 = vpop.permute.xlu0 %958
      %960 = vrot.lane.b32.xlu0 %v955, 90
      %v961 = vpop.permute.xlu0 %960
      %vm962 = vcmask 736256
      %v963 = vsel %vm962, %v957, %v959
      %v964 = vsel %vm962, %v959, %v961
      %v966 = vsel %vm268, %v949, 0
      %v968 = vsel %vm272, %v963, 0
      %v970 = vsel %vm272, %v964, 0
      %v972 = vsel %vm272, %v961, 0
      %974 = vmatpush.msra.mxu0 0.0
      %975 = vmatpush.msra.mxu0 0.0
      %976 = vmatpush.msra.mxu0 0.0
      %977 = vmatpush.msra.mxu0 0.0
      %978 = vmatpush.msra.mxu0 0.0
      %979 = vmatpush.msra.mxu0 0.0
      %980 = vmatpush.msra.mxu0 0.0
      %981 = vmatpush.msra.mxu0 0.0
      %982 = vmatpush.msra.mxu0 0.0
      %983 = vmatpush.msra.mxu0 0.0
      %984 = vmatpush.msra.mxu0 0.0
      %985 = vmatpush.msra.mxu0 0.0
      %986 = vmatpush.msra.mxu0 0.0
      %987 = vmatpush.msra.mxu0 0.0
      %988 = vmatpush.msra.mxu0 0.0
      %989 = vmatpush.msra.mxu0 %v968
      %990 = vmatmul.f32.gmra.mxu0 %v966
      %v991 = vpop.f32.mrf.mxu0
      %v992 = vadd.f32 0.0, %v991
      %993 = vdwg.mxu0
      %994 = vmatpush.msra.mxu0 0.0
      %995 = vmatpush.msra.mxu0 0.0
      %996 = vmatpush.msra.mxu0 0.0
      %997 = vmatpush.msra.mxu0 0.0
      %998 = vmatpush.msra.mxu0 0.0
      %999 = vmatpush.msra.mxu0 0.0
      %1000 = vmatpush.msra.mxu0 0.0
      %1001 = vmatpush.msra.mxu0 0.0
      %1002 = vmatpush.msra.mxu0 0.0
      %1003 = vmatpush.msra.mxu0 0.0
      %1004 = vmatpush.msra.mxu0 0.0
      %1005 = vmatpush.msra.mxu0 0.0
      %1006 = vmatpush.msra.mxu0 0.0
      %1007 = vmatpush.msra.mxu0 0.0
      %1008 = vmatpush.msra.mxu0 0.0
      %1009 = vmatpush.msra.mxu0 %v970
      %1010 = vmatmul.f32.gmra.mxu0 %v966
      %v1011 = vpop.f32.mrf.mxu0
      %v1012 = vadd.f32 0.0, %v1011
      %1013 = vdwg.mxu0
      %1014 = vmatpush.msra.mxu0 0.0
      %1015 = vmatpush.msra.mxu0 0.0
      %1016 = vmatpush.msra.mxu0 0.0
      %1017 = vmatpush.msra.mxu0 0.0
      %1018 = vmatpush.msra.mxu0 0.0
      %1019 = vmatpush.msra.mxu0 0.0
      %1020 = vmatpush.msra.mxu0 0.0
      %1021 = vmatpush.msra.mxu0 0.0
      %1022 = vmatpush.msra.mxu0 0.0
      %1023 = vmatpush.msra.mxu0 0.0
      %1024 = vmatpush.msra.mxu0 0.0
      %1025 = vmatpush.msra.mxu0 0.0
      %1026 = vmatpush.msra.mxu0 0.0
      %1027 = vmatpush.msra.mxu0 0.0
      %1028 = vmatpush.msra.mxu0 0.0
      %1029 = vmatpush.msra.mxu0 %v972
      %1030 = vmatmul.f32.gmra.mxu0 %v966
      %v1031 = vpop.f32.mrf.mxu0
      %v1032 = vadd.f32 0.0, %v1031
      %1033 = vdwg.mxu0
      %v1034 = vadd.f32 %v945, %v992
      %v1035 = vadd.f32 %v946, %v1012
      %v1036 = vadd.f32 %v947, %v1032
      %v1037 = vld [vmem:[%s2] sm:$0x7]
      %v1039 = vperm.slane %v1037, 0
      %v1040 = vperm.slane %v1037, 1
      %v1041 = vperm.slane %v1037, 2
      %v1045 = vmul.f32 %v1034, %v1039
      %v1046 = vmul.f32 %v1035, %v1040
      %v1047 = vmul.f32 %v1036, %v1041
      %1048 = vst [vmem:[%s237] sm:$0xff] %v1045
      %1049 = vst [vmem:[%s237 + $0x8] sm:$0xff] %v1046
      %vm1050 = vcmask 261120
      %1051 = vst.msk [vmem:[%s237 + $0x10] sm:$0xff] %vm1050, %v1047
      %v1052 = vadd.f32 %v1045, %v1046
      %v1053 = vsel %vm1050, %v1047, 0.0
      %v1054 = vadd.f32 %v1052, %v1053
      %1055 = vadd.xlane.f32.xlu0 %v1054
      %v1056 = vpop.xlane.xlu0 %1055
      %vm1057 = vcmask 7168
      %1058 = vst.msk [vmem:[%s241] sm:$0xff] %vm1057, %v1056
      %v1059 = vmul.f32 %v1045, %v1045
      %v1060 = vmul.f32 %v1046, %v1046
      %v1061 = vmul.f32 %v1047, %v1047
      %v1062 = vadd.f32 %v1059, %v1060
      %v1063 = vsel %vm1050, %v1061, 0.0
      %v1064 = vadd.f32 %v1062, %v1063
      %1065 = vadd.xlane.f32.xlu0 %v1064
      %v1066 = vpop.xlane.xlu0 %1065
      %1067 = vst.msk [vmem:[%s245] sm:$0xff] %vm1057, %v1066
      %p1068 = scmp.lt.s32.totalorder %s17, 1
      %s1069 = scalar_select %p1068, %s17, 1
      %s1070 = smul.addr %s1069, 3
      %s1071 = smul.addr %s1070, 8
      %s1072 = scalar_lea.vmem %s3, %s1071
      %p1073 = scmp.lt.s32.totalorder %s17, 1
      %s1074 = scalar_select %p1073, %s17, 1
      %s1075 = smul.addr %s1074, 8
      %s1076 = scalar_lea.vmem %s4, %s1075
      %p1077 = scmp.lt.s32.totalorder %s17, 1
      %s1078 = scalar_select %p1077, %s17, 1
      %s1079 = smul.addr %s1078, 8
      %s1080 = scalar_lea.vmem %s5, %s1079
      // Predicated region
      $region33: #{conv_block_forward.2} parent=31 // pred_check
        %p1081 = pneg %p103
      $region34: #{conv_block_forward.2} parent=31 // pred_check_branch
        %1083 = sbr.rel (%p1081) target = $region36
      $region35: #{conv_block_forward.2} parent=31 // pred_region
        _
      $region36: #{conv_block_forward.2} parent=31 // pred_fallthru
        _
      // Predicated region
      $region37: #{conv_block_forward.2} parent=31 // pred_check
        %p1084 = pneg %p129
      $region38: #{conv_block_forward.2} parent=31 // pred_check_branch
        %1086 = sbr.rel (%p1084) target = $region40
      $region39: #{conv_block_forward.2} parent=31 // pred_region
        _
      $region40: #{conv_block_forward.2} parent=31 // pred_fallthru
        _
      // Predicated region
      $region41: #{conv_block_forward.2} parent=31 // pred_check
        %p1087 = pneg %p155
      $region42: #{conv_block_forward.2} parent=31 // pred_check_branch
        %1089 = sbr.rel (%p1087) target = $region44
      $region43: #{conv_block_forward.2} parent=31 // pred_region
        _
      $region44: #{conv_block_forward.2} parent=31 // pred_fallthru
        _
    $region32: #{conv_block_forward.2} parent=5 // pred_fallthru
      _
    %p1090 = scmp.le.s32.totalorder 2, %s12
    // Predicated region
    $region45: #{conv_block_forward.2} parent=5 // pred_check
      %p1091 = pneg %p1090
    $region46: #{conv_block_forward.2} parent=5 // pred_check_branch
      %1093 = sbr.rel (%p1091) target = $region48
    $region47: #{conv_block_forward.2} parent=5 // pred_region
      %s1094 = ssub.s32 %s12, 2
      // Predicated region
      $region49: #{conv_block_forward.2} parent=47 // pred_check
        %p1095 = pneg %p109
      $region50: #{conv_block_forward.2} parent=47 // pred_check_branch
        %1097 = sbr.rel (%p1095) target = $region52
      $region51: #{conv_block_forward.2} parent=47 // pred_region
        %p1098 = scmp.lt.s32.totalorder %s18, 1
        %s1099 = scalar_select %p1098, %s18, 1
        %s1100 = smul.addr %s1099, 3
        %s1101 = smul.addr %s1100, 8
        %s1102 = scalar_lea.vmem %s3, %s1101
      $region52: #{conv_block_forward.2} parent=47 // pred_fallthru
        _
      // Predicated region
      $region53: #{conv_block_forward.2} parent=47 // pred_check
        %p1103 = pneg %p135
      $region54: #{conv_block_forward.2} parent=47 // pred_check_branch
        %1105 = sbr.rel (%p1103) target = $region56
      $region55: #{conv_block_forward.2} parent=47 // pred_region
        %p1106 = scmp.lt.s32.totalorder %s18, 1
        %s1107 = scalar_select %p1106, %s18, 1
        %s1108 = smul.addr %s1107, 8
        %s1109 = scalar_lea.vmem %s4, %s1108
      $region56: #{conv_block_forward.2} parent=47 // pred_fallthru
        _
      // Predicated region
      $region57: #{conv_block_forward.2} parent=47 // pred_check
        %p1110 = pneg %p161
      $region58: #{conv_block_forward.2} parent=47 // pred_check_branch
        %1112 = sbr.rel (%p1110) target = $region60
      $region59: #{conv_block_forward.2} parent=47 // pred_region
        %p1113 = scmp.lt.s32.totalorder %s18, 1
        %s1114 = scalar_select %p1113, %s18, 1
        %s1115 = smul.addr %s1114, 8
        %s1116 = scalar_lea.vmem %s5, %s1115
      $region60: #{conv_block_forward.2} parent=47 // pred_fallthru
        _
    $region48: #{conv_block_forward.2} parent=5 // pred_fallthru
      _
  $region6: #{conv_block_forward.2} parent=0 // loop_footer
    %s16 = sadd.s32 1, %s12
  $region7: #{conv_block_forward.2} parent=0 // loop_footer_branch
    %11 = sbr.rel target = $region3
  $region8: #{conv_block_forward.2} parent=0 // loop_exit
    _

</llo_original>
